<compile_context>
chip_gen: v7x
topology: tpu7x:2x2x1
jax: 0.10.0
libtpu: 0.0.40
codegen_flags: <defaults>
</compile_context>

<pallas_src>
import math
import jax
import jax.numpy as jnp
from jax.experimental import pallas as pl
from jax.experimental.pallas import tpu as pltpu

# ----------------------------- tiny BERT config ------------------------------
VOCAB = 128
MAX_POS = 16
HIDDEN = 32
N_HEADS = 2
HEAD_DIM = HIDDEN // N_HEADS
INTERMEDIATE = 64
N_LAYERS = 2
LN_EPS = 1e-12       # BERT LayerNorm eps
NORM_EPS = 1e-12     # F.normalize eps
ATTN_SCALE = 1.0 / math.sqrt(HEAD_DIM)
BIAS_W = 3 * HIDDEN  # width of a packed-bias row (largest bias is the qkv bias)


# ------------------------------ in-kernel helpers ----------------------------
def _layer_norm(x, g, b):
    mu = jnp.mean(x, axis=-1, keepdims=True)
    var = jnp.mean(jnp.square(x - mu), axis=-1, keepdims=True)
    return (x - mu) * jax.lax.rsqrt(var + LN_EPS) * g + b


def _gelu(x):
    # TODO(synk): HF BERT uses exact erf-GELU; tanh approximation kept for a clean
    # EUP lowering (max abs activation difference ~1e-3).
    return 0.5 * x * (1.0 + jnp.tanh(0.7978845608028654 * (x + 0.044715 * x * x * x)))


# ------------------------------ fused kernel ---------------------------------
def fused_bert_kernel(ids_ref, mask_ref, wemb_ref, pt_ref, embln_ref,
                      wqkv_ref, wo_ref, wi_ref, w2_ref,
                      bias_ref, ln_ref, o_ref):
    BB, S = ids_ref.shape[0], ids_ref.shape[1]
    V, H = wemb_ref.shape
    R = BB * S            # rows fed to every row-wise matmul / LayerNorm
    d = HEAD_DIM

    # ---- embedding lookup inside the kernel (one-hot @ table, table in VMEM) ----
    tok_iota = jax.lax.broadcasted_iota(jnp.int32, (BB, S, V), 2)
    onehot = (tok_iota == ids_ref[...]).astype(jnp.float32)              # (BB,S,V)
    emb = jax.lax.dot_general(onehot, wemb_ref[...],
                              (((2,), (0,)), ((), ())),
                              preferred_element_type=jnp.float32)        # (BB,S,H)
    emb = emb + pt_ref[...][None, :, :]        # + position + token-type(=0) rows
    x = _layer_norm(emb.reshape(R, H), embln_ref[0], embln_ref[1])       # (R,H) f32

    # additive attention bias, materialized ONCE at the per-head score shape
    attn_bias = jnp.broadcast_to((1.0 - mask_ref[...]) * (-1e9), (BB, S, S))

    # ---- N_LAYERS transformer encoder layers (static unroll, weights resident) ----
    for l in range(N_LAYERS):
        bp = bias_ref[l]               # (4, 3H) packed bias rows
        ln = ln_ref[l]                 # (4, H)  [ln1_g, ln1_b, ln2_g, ln2_b]
        wo_l = wo_ref[l]               # (H, H) bf16

        # fused Q/K/V projection (head-major packed, Q pre-scaled by 1/sqrt(d))
        qkv = jnp.dot(x.astype(jnp.bfloat16), wqkv_ref[l],
                      preferred_element_type=jnp.float32) + bp[0]        # (R, 3H)
        qkv3 = qkv.reshape(BB, S, 3 * H)

        # per-head attention via static lane slices; no transposes, no concat
        attn = None
        for h in range(N_HEADS):
            base = 3 * d * h
            q = qkv3[:, :, base:base + d].astype(jnp.bfloat16)           # (BB,S,d)
            k = qkv3[:, :, base + d:base + 2 * d].astype(jnp.bfloat16)   # (BB,S,d)
            v = qkv3[:, :, base + 2 * d:base + 3 * d].astype(jnp.bfloat16)

            s = jax.lax.dot_general(q, k, (((2,), (2,)), ((0,), (0,))),
                                    preferred_element_type=jnp.float32)  # (BB,S,S)
            s = s + attn_bias
            s = s - jnp.max(s, axis=-1, keepdims=True)                   # stable softmax
            p = jnp.exp(s)
            p = p * pl.reciprocal(jnp.sum(p, axis=-1, keepdims=True), approx=True)
            ctx = jax.lax.dot_general(p.astype(jnp.bfloat16), v,
                                      (((2,), (1,)), ((0,), (0,))),
                                      preferred_element_type=jnp.float32)  # (BB,S,d)
            # head h's slab of the output projection: ctx_h @ W_o[h*d:(h+1)*d, :]
            part = jnp.dot(ctx.reshape(R, d).astype(jnp.bfloat16),
                           wo_l[h * d:(h + 1) * d, :],
                           preferred_element_type=jnp.float32)             # (R, H)
            attn = part if attn is None else attn + part

        h1 = _layer_norm(x + attn + bp[1, :H], ln[0], ln[1])

        ff = jnp.dot(h1.astype(jnp.bfloat16), wi_ref[l],
                     preferred_element_type=jnp.float32) + bp[2, :INTERMEDIATE]
        ff = _gelu(ff)
        ff = jnp.dot(ff.astype(jnp.bfloat16), w2_ref[l],
                     preferred_element_type=jnp.float32) + bp[3, :H]
        x = _layer_norm(h1 + ff, ln[2], ln[3])

    # ---- CLS token + L2 normalize (F.normalize(p=2, dim=1)) ----
    cls = x.reshape(BB, S, H)[:, 0, :]                                    # (BB, H)
    ssq = jnp.sum(cls * cls, axis=-1, keepdims=True)
    inv = jax.lax.rsqrt(jnp.maximum(ssq, NORM_EPS * NORM_EPS))            # 1/max(||x||,eps)
    o_ref[...] = (cls * inv).astype(o_ref.dtype)


# -------------------------------- wrapper ------------------------------------
def pick_block_batch(batch, seq, target_rows=256):
    """Sequences per grid step. Fills the MXU M dim with ~target_rows rows
    (256 for v6e/v7x, use 128 when tuning for v5e).  Output-block sublane rule
    requires BB % 8 == 0 or BB == batch; for v7x keep batch//BB even when batch
    is large so both TensorCores stay busy."""
    if batch * seq <= target_rows:
        return batch                               # everything in one grid step
    bb = max(8, (target_rows // seq) // 8 * 8)
    while bb > 8 and batch % bb:
        bb -= 8
    return bb if batch % bb == 0 else batch


def bert_embedding_forward(params, input_ids, attention_mask):
    B, S = input_ids.shape
    assert S <= MAX_POS, "sequence length exceeds the position-embedding table"
    H, I, L = HIDDEN, INTERMEDIATE, N_LAYERS
    BB = pick_block_batch(B, S)
    assert B % BB == 0
    grid = (B // BB,)

    ids3 = input_ids.astype(jnp.int32)[..., None]                # (B, S, 1)
    mask3 = attention_mask.astype(jnp.float32)[:, None, :]       # (B, 1, S)
    # position + token-type(=0) embedding rows, precombined constant (S, H)
    pos_type = (params["pos_emb"][:S] + params["type_emb"][0][None, :]).astype(jnp.float32)

    def full(shape):   # constant-index (resident) block
        return pl.BlockSpec(shape, lambda b, _n=len(shape): (0,) * _n)

    in_specs = [
        pl.BlockSpec((BB, S, 1), lambda b: (b, 0, 0)),           # token ids
        pl.BlockSpec((BB, 1, S), lambda b: (b, 0, 0)),           # attention mask
        full((VOCAB, H)),                                        # word embedding table
        full((S, H)),                                            # pos + type embedding rows
        full((2, H)),                                            # embedding LN gamma/beta
        full((L, H, 3 * H)),                                     # packed Q/K/V weights (bf16)
        full((L, H, H)),                                         # attention output weight (bf16)
        full((L, H, I)),                                         # FF intermediate weight (bf16)
        full((L, I, H)),                                         # FF output weight (bf16)
        full((L, 4, BIAS_W)),                                    # packed biases (f32)
        full((L, 4, H)),                                         # packed LN gammas/betas (f32)
    ]

    out = pl.pallas_call(
        fused_bert_kernel,
        out_shape=jax.ShapeDtypeStruct((B, H), jnp.float32),
        grid=grid,
        in_specs=in_specs,
        out_specs=pl.BlockSpec((BB, H), lambda b: (b, 0)),
        compiler_params=pltpu.CompilerParams(
            dimension_semantics=("parallel",)),                  # v7x: batch blocks split across TCs
    )(ids3, mask3, params["word_emb"], pos_type, params["emb_ln"],
      params["w_qkv"], params["w_o"], params["w_i"], params["w_2"],
      params["bias_pack"], params["ln_pack"])

    return out                                                   # (B, H), unit L2 norm


# --------------------------- parameter construction --------------------------
def init_params(key):
    def nrm(k, shape):
        return (0.02 * jax.random.normal(k, shape)).astype(jnp.float32)

    H, I, L, d = HIDDEN, INTERMEDIATE, N_LAYERS, HEAD_DIM
    keys = jax.random.split(key, 3 + L)
    params = {
        "word_emb": nrm(keys[0], (VOCAB, H)),
        "pos_emb": nrm(keys[1], (MAX_POS, H)),
        "type_emb": nrm(keys[2], (2, H)),
        "emb_ln": jnp.stack([jnp.ones((H,), jnp.float32),
                             jnp.zeros((H,), jnp.float32)]),     # (2, H) -> [gamma, beta]
    }

    w_qkv, w_o, w_i, w_2, bias_pack, ln_pack = [], [], [], [], [], []
    for li in range(L):
        lk = jax.random.split(keys[3 + li], 10)
        wq, wk, wv = nrm(lk[0], (H, H)), nrm(lk[1], (H, H)), nrm(lk[2], (H, H))
        b_qkv = nrm(lk[6], (3 * H,))
        bq, bk, bv = b_qkv[:H], b_qkv[H:2 * H], b_qkv[2 * H:]

        # Fold the 1/sqrt(head_dim) attention scale into Q at init (no in-kernel mul).
        wq = wq * ATTN_SCALE
        bq = bq * ATTN_SCALE

        # Head-major column packing: [q_h0|k_h0|v_h0 | q_h1|k_h1|v_h1 | ...] so per-head
        # q/k/v are static lane slices of the fused QKV output inside the kernel.
        cols, bcols = [], []
        for h in range(N_HEADS):
            sl = slice(h * d, (h + 1) * d)
            cols += [wq[:, sl], wk[:, sl], wv[:, sl]]
            bcols += [bq[sl], bk[sl], bv[sl]]
        w_qkv.append(jnp.concatenate(cols, axis=-1))             # (H, 3H) head-major
        b_qkv_hm = jnp.concatenate(bcols)                        # (3H,)

        w_o.append(nrm(lk[3], (H, H)))
        w_i.append(nrm(lk[4], (H, I)))
        w_2.append(nrm(lk[5], (I, H)))
        b_o, b_i, b_2 = nrm(lk[7], (H,)), nrm(lk[8], (I,)), nrm(lk[9], (H,))

        # bias rows padded to width 3H: [qkv | attn-out | FF-in | FF-out]
        bias_pack.append(jnp.stack([
            b_qkv_hm,
            jnp.pad(b_o, (0, BIAS_W - H)),
            jnp.pad(b_i, (0, BIAS_W - I)),
            jnp.pad(b_2, (0, BIAS_W - H)),
        ]))
        # LN rows: [ln1_gamma, ln1_beta, ln2_gamma, ln2_beta]
        ln_pack.append(jnp.stack([jnp.ones((H,), jnp.float32),
                                  jnp.zeros((H,), jnp.float32),
                                  jnp.ones((H,), jnp.float32),
                                  jnp.zeros((H,), jnp.float32)]))

    # Matmul weights stored bf16 (MXU-native on v5e/v6e/v7x); biases/LN stay f32.
    params["w_qkv"] = jnp.stack(w_qkv).astype(jnp.bfloat16)      # (L, H, 3H)
    params["w_o"] = jnp.stack(w_o).astype(jnp.bfloat16)          # (L, H, H)
    params["w_i"] = jnp.stack(w_i).astype(jnp.bfloat16)          # (L, H, I)
    params["w_2"] = jnp.stack(w_2).astype(jnp.bfloat16)          # (L, I, H)
    params["bias_pack"] = jnp.stack(bias_pack)                   # (L, 4, 3H) f32
    params["ln_pack"] = jnp.stack(ln_pack)                       # (L, 4, H)  f32
    return params


# ----------------------------------- main -------------------------------------
if __name__ == "__main__":
    B, S = 2, 8
    key = jax.random.PRNGKey(0)
    pkey, idkey = jax.random.split(key)

    params = init_params(pkey)
    input_ids = jax.random.randint(idkey, (B, S), 0, VOCAB, dtype=jnp.int32)
    attention_mask = jnp.array(
        [[1, 1, 1, 1, 1, 1, 1, 1],
         [1, 1, 1, 1, 1, 1, 0, 0]], dtype=jnp.float32)

    out = bert_embedding_forward(params, input_ids, attention_mask)
    out = jax.block_until_ready(out)

    assert out.shape == (B, HIDDEN)
    # each row must be L2-normalized (F.normalize(p=2, dim=1) semantics)
    norms = jnp.sqrt(jnp.sum(out * out, axis=-1))
    assert bool(jnp.all(jnp.abs(norms - 1.0) < 1e-4))
    print("KERNEL_OK")
</pallas_src>

<mosaic_0001>
module attributes {stable_mosaic.version = 11 : i64} {
  func.func @fused_bert_kernel(%arg0: i32, %arg1: memref<2x8x1xi32, #tpu.memory_space<vmem>>, %arg2: memref<2x1x8xf32, #tpu.memory_space<vmem>>, %arg3: memref<128x32xf32, #tpu.memory_space<vmem>>, %arg4: memref<8x32xf32, #tpu.memory_space<vmem>>, %arg5: memref<2x32xf32, #tpu.memory_space<vmem>>, %arg6: memref<2x32x96xbf16, #tpu.memory_space<vmem>>, %arg7: memref<2x32x32xbf16, #tpu.memory_space<vmem>>, %arg8: memref<2x32x64xbf16, #tpu.memory_space<vmem>>, %arg9: memref<2x64x32xbf16, #tpu.memory_space<vmem>>, %arg10: memref<2x4x96xf32, #tpu.memory_space<vmem>>, %arg11: memref<2x4x32xf32, #tpu.memory_space<vmem>>, %arg12: memref<2x32xf32, #tpu.memory_space<vmem>>) attributes {dimension_semantics = [#tpu.dimension_semantics<parallel>], iteration_bounds = array<i64: 1>, scalar_prefetch = 0 : i64, scratch_operands = 0 : i64, tpu.core_type = #tpu.core_type<tc>, window_params = [{transform_indices = @transform_0, window_bounds = array<i64: 2, 8, 1>}, {transform_indices = @transform_1, window_bounds = array<i64: 2, 1, 8>}, {pipeline_mode = #tpu.pipeline_mode<synchronous>, transform_indices = @transform_2, window_bounds = array<i64: 128, 32>}, {pipeline_mode = #tpu.pipeline_mode<synchronous>, transform_indices = @transform_3, window_bounds = array<i64: 8, 32>}, {pipeline_mode = #tpu.pipeline_mode<synchronous>, transform_indices = @transform_4, window_bounds = array<i64: 2, 32>}, {pipeline_mode = #tpu.pipeline_mode<synchronous>, transform_indices = @transform_5, window_bounds = array<i64: 2, 32, 96>}, {pipeline_mode = #tpu.pipeline_mode<synchronous>, transform_indices = @transform_6, window_bounds = array<i64: 2, 32, 32>}, {pipeline_mode = #tpu.pipeline_mode<synchronous>, transform_indices = @transform_7, window_bounds = array<i64: 2, 32, 64>}, {pipeline_mode = #tpu.pipeline_mode<synchronous>, transform_indices = @transform_8, window_bounds = array<i64: 2, 64, 32>}, {pipeline_mode = #tpu.pipeline_mode<synchronous>, transform_indices = @transform_9, window_bounds = array<i64: 2, 4, 96>}, {pipeline_mode = #tpu.pipeline_mode<synchronous>, transform_indices = @transform_10, window_bounds = array<i64: 2, 4, 32>}, {transform_indices = @transform_11, window_bounds = array<i64: 2, 32>}]} {
    %0 = tpu.iota {dimensions = array<i32: 2>} : vector<2x8x128xi32>
    %c0 = arith.constant 0 : index
    %c0_0 = arith.constant 0 : index
    %c0_1 = arith.constant 0 : index
    %1 = vector.load %arg1[%c0, %c0_0, %c0_1] : memref<2x8x1xi32, #tpu.memory_space<vmem>>, vector<2x8x1xi32>
    %2 = vector.broadcast %1 : vector<2x8x1xi32> to vector<2x8x128xi32>
    %3 = arith.cmpi eq, %0, %2 : vector<2x8x128xi32>
    %4 = arith.extui %3 : vector<2x8x128xi1> to vector<2x8x128xi32>
    %5 = arith.sitofp %4 : vector<2x8x128xi32> to vector<2x8x128xf32>
    %c0_2 = arith.constant 0 : index
    %c0_3 = arith.constant 0 : index
    %6 = vector.load %arg3[%c0_2, %c0_3] : memref<128x32xf32, #tpu.memory_space<vmem>>, vector<128x32xf32>
    %cst = arith.constant dense<0.000000e+00> : vector<2x8x32xf32>
    %7 = tpu.matmul %5, %6, %cst {dimension_numbers = #tpu.dot_dimension_numbers<[2], [0], [0, 1], [1], [0, 0, 0, 1, 1, 1], [], []>} : vector<2x8x128xf32>, vector<128x32xf32>, vector<2x8x32xf32> -> vector<2x8x32xf32>
    %c0_4 = arith.constant 0 : index
    %c0_5 = arith.constant 0 : index
    %8 = vector.load %arg4[%c0_4, %c0_5] : memref<8x32xf32, #tpu.memory_space<vmem>>, vector<8x32xf32>
    %9 = vector.shape_cast %8 : vector<8x32xf32> to vector<1x8x32xf32>
    %10 = vector.broadcast %9 : vector<1x8x32xf32> to vector<2x8x32xf32>
    %11 = arith.addf %7, %10 : vector<2x8x32xf32>
    %12 = vector.shape_cast %11 : vector<2x8x32xf32> to vector<16x32xf32>
    %c0_6 = arith.constant 0 : index
    %c0_7 = arith.constant 0 : index
    %13 = vector.load %arg5[%c0_6, %c0_7] : memref<2x32xf32, #tpu.memory_space<vmem>>, vector<1x32xf32>
    %14 = vector.shape_cast %13 : vector<1x32xf32> to vector<32xf32>
    %c1 = arith.constant 1 : index
    %c0_8 = arith.constant 0 : index
    %15 = vector.load %arg5[%c1, %c0_8] : memref<2x32xf32, #tpu.memory_space<vmem>>, vector<1x32xf32>
    %16 = vector.shape_cast %15 : vector<1x32xf32> to vector<32xf32>
    %cst_9 = arith.constant dense<0.000000e+00> : vector<16xf32>
    %17 = vector.multi_reduction <add>, %12, %cst_9 [1] : vector<16x32xf32> to vector<16xf32>
    %18 = vector.shape_cast %17 : vector<16xf32> to vector<16x1xf32>
    %cst_10 = arith.constant 3.200000e+01 : f32
    %19 = vector.broadcast %cst_10 : f32 to vector<16x1xf32>
    %20 = arith.divf %18, %19 : vector<16x1xf32>
    %21 = vector.broadcast %20 : vector<16x1xf32> to vector<16x32xf32>
    %22 = arith.subf %12, %21 : vector<16x32xf32>
    %23 = arith.mulf %22, %22 : vector<16x32xf32>
    %cst_11 = arith.constant dense<0.000000e+00> : vector<16xf32>
    %24 = vector.multi_reduction <add>, %23, %cst_11 [1] : vector<16x32xf32> to vector<16xf32>
    %25 = vector.shape_cast %24 : vector<16xf32> to vector<16x1xf32>
    %cst_12 = arith.constant 3.200000e+01 : f32
    %26 = vector.broadcast %cst_12 : f32 to vector<16x1xf32>
    %27 = arith.divf %25, %26 : vector<16x1xf32>
    %28 = vector.broadcast %20 : vector<16x1xf32> to vector<16x32xf32>
    %29 = arith.subf %12, %28 : vector<16x32xf32>
    %cst_13 = arith.constant 9.99999996E-13 : f32
    %30 = vector.broadcast %cst_13 : f32 to vector<16x1xf32>
    %31 = arith.addf %27, %30 : vector<16x1xf32>
    %32 = math.rsqrt %31 : vector<16x1xf32>
    %33 = vector.broadcast %32 : vector<16x1xf32> to vector<16x32xf32>
    %34 = arith.mulf %29, %33 : vector<16x32xf32>
    %35 = vector.shape_cast %14 : vector<32xf32> to vector<1x32xf32>
    %36 = vector.broadcast %35 : vector<1x32xf32> to vector<16x32xf32>
    %37 = arith.mulf %34, %36 : vector<16x32xf32>
    %38 = vector.shape_cast %16 : vector<32xf32> to vector<1x32xf32>
    %39 = vector.broadcast %38 : vector<1x32xf32> to vector<16x32xf32>
    %40 = arith.addf %37, %39 : vector<16x32xf32>
    %c0_14 = arith.constant 0 : index
    %c0_15 = arith.constant 0 : index
    %c0_16 = arith.constant 0 : index
    %41 = vector.load %arg2[%c0_14, %c0_15, %c0_16] : memref<2x1x8xf32, #tpu.memory_space<vmem>>, vector<2x1x8xf32>
    %cst_17 = arith.constant 1.000000e+00 : f32
    %42 = vector.broadcast %cst_17 : f32 to vector<2x1x8xf32>
    %43 = arith.subf %42, %41 : vector<2x1x8xf32>
    %cst_18 = arith.constant -1.000000e+09 : f32
    %44 = vector.broadcast %cst_18 : f32 to vector<2x1x8xf32>
    %45 = arith.mulf %43, %44 : vector<2x1x8xf32>
    %46 = vector.shape_cast %45 : vector<2x1x8xf32> to vector<2x1x8xf32>
    %47 = vector.broadcast %46 : vector<2x1x8xf32> to vector<2x8x8xf32>
    %c0_19 = arith.constant 0 : index
    %c0_20 = arith.constant 0 : index
    %c0_21 = arith.constant 0 : index
    %48 = vector.load %arg10[%c0_19, %c0_20, %c0_21] : memref<2x4x96xf32, #tpu.memory_space<vmem>>, vector<1x4x96xf32>
    %49 = vector.shape_cast %48 : vector<1x4x96xf32> to vector<4x96xf32>
    %c0_22 = arith.constant 0 : index
    %c0_23 = arith.constant 0 : index
    %c0_24 = arith.constant 0 : index
    %50 = vector.load %arg11[%c0_22, %c0_23, %c0_24] : memref<2x4x32xf32, #tpu.memory_space<vmem>>, vector<1x4x32xf32>
    %51 = vector.shape_cast %50 : vector<1x4x32xf32> to vector<4x32xf32>
    %c0_25 = arith.constant 0 : index
    %c0_26 = arith.constant 0 : index
    %c0_27 = arith.constant 0 : index
    %52 = vector.load %arg7[%c0_25, %c0_26, %c0_27] : memref<2x32x32xbf16, #tpu.memory_space<vmem>>, vector<1x32x32xbf16>
    %53 = vector.shape_cast %52 : vector<1x32x32xbf16> to vector<32x32xbf16>
    %54 = arith.truncf %40 : vector<16x32xf32> to vector<16x32xbf16>
    %c0_28 = arith.constant 0 : index
    %c0_29 = arith.constant 0 : index
    %c0_30 = arith.constant 0 : index
    %55 = vector.load %arg6[%c0_28, %c0_29, %c0_30] : memref<2x32x96xbf16, #tpu.memory_space<vmem>>, vector<1x32x96xbf16>
    %56 = vector.shape_cast %55 : vector<1x32x96xbf16> to vector<32x96xbf16>
    %cst_31 = arith.constant dense<0.000000e+00> : vector<16x96xf32>
    %57 = tpu.matmul %54, %56, %cst_31 {dimension_numbers = #tpu.dot_dimension_numbers<[1], [0], [0], [1], [0, 0, 1, 1], [], []>} : vector<16x32xbf16>, vector<32x96xbf16>, vector<16x96xf32> -> vector<16x96xf32>
    %58 = vector.extract_strided_slice %49 {offsets = [0, 0], sizes = [1, 96], strides = [1, 1]} : vector<4x96xf32> to vector<1x96xf32>
    %59 = vector.shape_cast %58 : vector<1x96xf32> to vector<96xf32>
    %60 = vector.shape_cast %59 : vector<96xf32> to vector<1x96xf32>
    %61 = vector.broadcast %60 : vector<1x96xf32> to vector<16x96xf32>
    %62 = arith.addf %57, %61 : vector<16x96xf32>
    %63 = vector.shape_cast %62 : vector<16x96xf32> to vector<2x8x96xf32>
    %64 = vector.extract_strided_slice %63 {offsets = [0, 0, 0], sizes = [2, 8, 16], strides = [1, 1, 1]} : vector<2x8x96xf32> to vector<2x8x16xf32>
    %65 = arith.truncf %64 : vector<2x8x16xf32> to vector<2x8x16xbf16>
    %66 = vector.extract_strided_slice %63 {offsets = [0, 0, 16], sizes = [2, 8, 16], strides = [1, 1, 1]} : vector<2x8x96xf32> to vector<2x8x16xf32>
    %67 = arith.truncf %66 : vector<2x8x16xf32> to vector<2x8x16xbf16>
    %68 = vector.extract_strided_slice %63 {offsets = [0, 0, 32], sizes = [2, 8, 16], strides = [1, 1, 1]} : vector<2x8x96xf32> to vector<2x8x16xf32>
    %69 = arith.truncf %68 : vector<2x8x16xf32> to vector<2x8x16xbf16>
    %cst_32 = arith.constant dense<0.000000e+00> : vector<2x8x8xf32>
    %70 = tpu.matmul %65, %67, %cst_32 {dimension_numbers = #tpu.dot_dimension_numbers<[2], [2], [1], [1], [0, 0, 0, 1, 1, 1], [0], [0]>} : vector<2x8x16xbf16>, vector<2x8x16xbf16>, vector<2x8x8xf32> -> vector<2x8x8xf32>
    %71 = arith.addf %70, %47 : vector<2x8x8xf32>
    %cst_33 = arith.constant dense<0xFF800000> : vector<2x8xf32>
    %72 = vector.multi_reduction <maximumf>, %71, %cst_33 [2] : vector<2x8x8xf32> to vector<2x8xf32>
    %73 = vector.shape_cast %72 : vector<2x8xf32> to vector<2x8x1xf32>
    %74 = vector.broadcast %73 : vector<2x8x1xf32> to vector<2x8x8xf32>
    %75 = arith.subf %71, %74 : vector<2x8x8xf32>
    %76 = math.exp %75 : vector<2x8x8xf32>
    %cst_34 = arith.constant dense<0.000000e+00> : vector<2x8xf32>
    %77 = vector.multi_reduction <add>, %76, %cst_34 [2] : vector<2x8x8xf32> to vector<2x8xf32>
    %78 = vector.shape_cast %77 : vector<2x8xf32> to vector<2x8x1xf32>
    %79 = tpu.reciprocal %78 {approx = true} : vector<2x8x1xf32> -> vector<2x8x1xf32>
    %80 = vector.broadcast %79 : vector<2x8x1xf32> to vector<2x8x8xf32>
    %81 = arith.mulf %76, %80 : vector<2x8x8xf32>
    %82 = arith.truncf %81 : vector<2x8x8xf32> to vector<2x8x8xbf16>
    %cst_35 = arith.constant dense<0.000000e+00> : vector<2x8x16xf32>
    %83 = tpu.matmul %82, %69, %cst_35 {dimension_numbers = #tpu.dot_dimension_numbers<[2], [1], [1], [2], [0, 0, 0, 1, 1, 2], [0], [0]>} : vector<2x8x8xbf16>, vector<2x8x16xbf16>, vector<2x8x16xf32> -> vector<2x8x16xf32>
    %84 = vector.shape_cast %83 : vector<2x8x16xf32> to vector<16x16xf32>
    %85 = arith.truncf %84 : vector<16x16xf32> to vector<16x16xbf16>
    %86 = vector.extract_strided_slice %53 {offsets = [0, 0], sizes = [16, 32], strides = [1, 1]} : vector<32x32xbf16> to vector<16x32xbf16>
    %cst_36 = arith.constant dense<0.000000e+00> : vector<16x32xf32>
    %87 = tpu.matmul %85, %86, %cst_36 {dimension_numbers = #tpu.dot_dimension_numbers<[1], [0], [0], [1], [0, 0, 1, 1], [], []>} : vector<16x16xbf16>, vector<16x32xbf16>, vector<16x32xf32> -> vector<16x32xf32>
    %88 = vector.extract_strided_slice %63 {offsets = [0, 0, 48], sizes = [2, 8, 16], strides = [1, 1, 1]} : vector<2x8x96xf32> to vector<2x8x16xf32>
    %89 = arith.truncf %88 : vector<2x8x16xf32> to vector<2x8x16xbf16>
    %90 = vector.extract_strided_slice %63 {offsets = [0, 0, 64], sizes = [2, 8, 16], strides = [1, 1, 1]} : vector<2x8x96xf32> to vector<2x8x16xf32>
    %91 = arith.truncf %90 : vector<2x8x16xf32> to vector<2x8x16xbf16>
    %92 = vector.extract_strided_slice %63 {offsets = [0, 0, 80], sizes = [2, 8, 16], strides = [1, 1, 1]} : vector<2x8x96xf32> to vector<2x8x16xf32>
    %93 = arith.truncf %92 : vector<2x8x16xf32> to vector<2x8x16xbf16>
    %cst_37 = arith.constant dense<0.000000e+00> : vector<2x8x8xf32>
    %94 = tpu.matmul %89, %91, %cst_37 {dimension_numbers = #tpu.dot_dimension_numbers<[2], [2], [1], [1], [0, 0, 0, 1, 1, 1], [0], [0]>} : vector<2x8x16xbf16>, vector<2x8x16xbf16>, vector<2x8x8xf32> -> vector<2x8x8xf32>
    %95 = arith.addf %94, %47 : vector<2x8x8xf32>
    %cst_38 = arith.constant dense<0xFF800000> : vector<2x8xf32>
    %96 = vector.multi_reduction <maximumf>, %95, %cst_38 [2] : vector<2x8x8xf32> to vector<2x8xf32>
    %97 = vector.shape_cast %96 : vector<2x8xf32> to vector<2x8x1xf32>
    %98 = vector.broadcast %97 : vector<2x8x1xf32> to vector<2x8x8xf32>
    %99 = arith.subf %95, %98 : vector<2x8x8xf32>
    %100 = math.exp %99 : vector<2x8x8xf32>
    %cst_39 = arith.constant dense<0.000000e+00> : vector<2x8xf32>
    %101 = vector.multi_reduction <add>, %100, %cst_39 [2] : vector<2x8x8xf32> to vector<2x8xf32>
    %102 = vector.shape_cast %101 : vector<2x8xf32> to vector<2x8x1xf32>
    %103 = tpu.reciprocal %102 {approx = true} : vector<2x8x1xf32> -> vector<2x8x1xf32>
    %104 = vector.broadcast %103 : vector<2x8x1xf32> to vector<2x8x8xf32>
    %105 = arith.mulf %100, %104 : vector<2x8x8xf32>
    %106 = arith.truncf %105 : vector<2x8x8xf32> to vector<2x8x8xbf16>
    %cst_40 = arith.constant dense<0.000000e+00> : vector<2x8x16xf32>
    %107 = tpu.matmul %106, %93, %cst_40 {dimension_numbers = #tpu.dot_dimension_numbers<[2], [1], [1], [2], [0, 0, 0, 1, 1, 2], [0], [0]>} : vector<2x8x8xbf16>, vector<2x8x16xbf16>, vector<2x8x16xf32> -> vector<2x8x16xf32>
    %108 = vector.shape_cast %107 : vector<2x8x16xf32> to vector<16x16xf32>
    %109 = arith.truncf %108 : vector<16x16xf32> to vector<16x16xbf16>
    %110 = vector.extract_strided_slice %53 {offsets = [16, 0], sizes = [16, 32], strides = [1, 1]} : vector<32x32xbf16> to vector<16x32xbf16>
    %cst_41 = arith.constant dense<0.000000e+00> : vector<16x32xf32>
    %111 = tpu.matmul %109, %110, %cst_41 {dimension_numbers = #tpu.dot_dimension_numbers<[1], [0], [0], [1], [0, 0, 1, 1], [], []>} : vector<16x16xbf16>, vector<16x32xbf16>, vector<16x32xf32> -> vector<16x32xf32>
    %112 = arith.addf %87, %111 : vector<16x32xf32>
    %113 = arith.addf %40, %112 : vector<16x32xf32>
    %114 = vector.extract_strided_slice %49 {offsets = [1, 0], sizes = [1, 32], strides = [1, 1]} : vector<4x96xf32> to vector<1x32xf32>
    %115 = vector.shape_cast %114 : vector<1x32xf32> to vector<32xf32>
    %116 = vector.shape_cast %115 : vector<32xf32> to vector<1x32xf32>
    %117 = vector.broadcast %116 : vector<1x32xf32> to vector<16x32xf32>
    %118 = arith.addf %113, %117 : vector<16x32xf32>
    %119 = vector.extract_strided_slice %51 {offsets = [0, 0], sizes = [1, 32], strides = [1, 1]} : vector<4x32xf32> to vector<1x32xf32>
    %120 = vector.shape_cast %119 : vector<1x32xf32> to vector<32xf32>
    %121 = vector.extract_strided_slice %51 {offsets = [1, 0], sizes = [1, 32], strides = [1, 1]} : vector<4x32xf32> to vector<1x32xf32>
    %122 = vector.shape_cast %121 : vector<1x32xf32> to vector<32xf32>
    %cst_42 = arith.constant dense<0.000000e+00> : vector<16xf32>
    %123 = vector.multi_reduction <add>, %118, %cst_42 [1] : vector<16x32xf32> to vector<16xf32>
    %124 = vector.shape_cast %123 : vector<16xf32> to vector<16x1xf32>
    %cst_43 = arith.constant 3.200000e+01 : f32
    %125 = vector.broadcast %cst_43 : f32 to vector<16x1xf32>
    %126 = arith.divf %124, %125 : vector<16x1xf32>
    %127 = vector.broadcast %126 : vector<16x1xf32> to vector<16x32xf32>
    %128 = arith.subf %118, %127 : vector<16x32xf32>
    %129 = arith.mulf %128, %128 : vector<16x32xf32>
    %cst_44 = arith.constant dense<0.000000e+00> : vector<16xf32>
    %130 = vector.multi_reduction <add>, %129, %cst_44 [1] : vector<16x32xf32> to vector<16xf32>
    %131 = vector.shape_cast %130 : vector<16xf32> to vector<16x1xf32>
    %cst_45 = arith.constant 3.200000e+01 : f32
    %132 = vector.broadcast %cst_45 : f32 to vector<16x1xf32>
    %133 = arith.divf %131, %132 : vector<16x1xf32>
    %134 = vector.broadcast %126 : vector<16x1xf32> to vector<16x32xf32>
    %135 = arith.subf %118, %134 : vector<16x32xf32>
    %cst_46 = arith.constant 9.99999996E-13 : f32
    %136 = vector.broadcast %cst_46 : f32 to vector<16x1xf32>
    %137 = arith.addf %133, %136 : vector<16x1xf32>
    %138 = math.rsqrt %137 : vector<16x1xf32>
    %139 = vector.broadcast %138 : vector<16x1xf32> to vector<16x32xf32>
    %140 = arith.mulf %135, %139 : vector<16x32xf32>
    %141 = vector.shape_cast %120 : vector<32xf32> to vector<1x32xf32>
    %142 = vector.broadcast %141 : vector<1x32xf32> to vector<16x32xf32>
    %143 = arith.mulf %140, %142 : vector<16x32xf32>
    %144 = vector.shape_cast %122 : vector<32xf32> to vector<1x32xf32>
    %145 = vector.broadcast %144 : vector<1x32xf32> to vector<16x32xf32>
    %146 = arith.addf %143, %145 : vector<16x32xf32>
    %147 = arith.truncf %146 : vector<16x32xf32> to vector<16x32xbf16>
    %c0_47 = arith.constant 0 : index
    %c0_48 = arith.constant 0 : index
    %c0_49 = arith.constant 0 : index
    %148 = vector.load %arg8[%c0_47, %c0_48, %c0_49] : memref<2x32x64xbf16, #tpu.memory_space<vmem>>, vector<1x32x64xbf16>
    %149 = vector.shape_cast %148 : vector<1x32x64xbf16> to vector<32x64xbf16>
    %cst_50 = arith.constant dense<0.000000e+00> : vector<16x64xf32>
    %150 = tpu.matmul %147, %149, %cst_50 {dimension_numbers = #tpu.dot_dimension_numbers<[1], [0], [0], [1], [0, 0, 1, 1], [], []>} : vector<16x32xbf16>, vector<32x64xbf16>, vector<16x64xf32> -> vector<16x64xf32>
    %151 = vector.extract_strided_slice %49 {offsets = [2, 0], sizes = [1, 64], strides = [1, 1]} : vector<4x96xf32> to vector<1x64xf32>
    %152 = vector.shape_cast %151 : vector<1x64xf32> to vector<64xf32>
    %153 = vector.shape_cast %152 : vector<64xf32> to vector<1x64xf32>
    %154 = vector.broadcast %153 : vector<1x64xf32> to vector<16x64xf32>
    %155 = arith.addf %150, %154 : vector<16x64xf32>
    %cst_51 = arith.constant 5.000000e-01 : f32
    %156 = vector.broadcast %cst_51 : f32 to vector<16x64xf32>
    %157 = arith.mulf %156, %155 : vector<16x64xf32>
    %cst_52 = arith.constant 4.471500e-02 : f32
    %158 = vector.broadcast %cst_52 : f32 to vector<16x64xf32>
    %159 = arith.mulf %158, %155 : vector<16x64xf32>
    %160 = arith.mulf %159, %155 : vector<16x64xf32>
    %161 = arith.mulf %160, %155 : vector<16x64xf32>
    %162 = arith.addf %155, %161 : vector<16x64xf32>
    %cst_53 = arith.constant 0.797884583 : f32
    %163 = vector.broadcast %cst_53 : f32 to vector<16x64xf32>
    %164 = arith.mulf %163, %162 : vector<16x64xf32>
    %165 = math.tanh %164 : vector<16x64xf32>
    %cst_54 = arith.constant 1.000000e+00 : f32
    %166 = vector.broadcast %cst_54 : f32 to vector<16x64xf32>
    %167 = arith.addf %166, %165 : vector<16x64xf32>
    %168 = arith.mulf %157, %167 : vector<16x64xf32>
    %169 = arith.truncf %168 : vector<16x64xf32> to vector<16x64xbf16>
    %c0_55 = arith.constant 0 : index
    %c0_56 = arith.constant 0 : index
    %c0_57 = arith.constant 0 : index
    %170 = vector.load %arg9[%c0_55, %c0_56, %c0_57] : memref<2x64x32xbf16, #tpu.memory_space<vmem>>, vector<1x64x32xbf16>
    %171 = vector.shape_cast %170 : vector<1x64x32xbf16> to vector<64x32xbf16>
    %cst_58 = arith.constant dense<0.000000e+00> : vector<16x32xf32>
    %172 = tpu.matmul %169, %171, %cst_58 {dimension_numbers = #tpu.dot_dimension_numbers<[1], [0], [0], [1], [0, 0, 1, 1], [], []>} : vector<16x64xbf16>, vector<64x32xbf16>, vector<16x32xf32> -> vector<16x32xf32>
    %173 = vector.extract_strided_slice %49 {offsets = [3, 0], sizes = [1, 32], strides = [1, 1]} : vector<4x96xf32> to vector<1x32xf32>
    %174 = vector.shape_cast %173 : vector<1x32xf32> to vector<32xf32>
    %175 = vector.shape_cast %174 : vector<32xf32> to vector<1x32xf32>
    %176 = vector.broadcast %175 : vector<1x32xf32> to vector<16x32xf32>
    %177 = arith.addf %172, %176 : vector<16x32xf32>
    %178 = arith.addf %146, %177 : vector<16x32xf32>
    %179 = vector.extract_strided_slice %51 {offsets = [2, 0], sizes = [1, 32], strides = [1, 1]} : vector<4x32xf32> to vector<1x32xf32>
    %180 = vector.shape_cast %179 : vector<1x32xf32> to vector<32xf32>
    %181 = vector.extract_strided_slice %51 {offsets = [3, 0], sizes = [1, 32], strides = [1, 1]} : vector<4x32xf32> to vector<1x32xf32>
    %182 = vector.shape_cast %181 : vector<1x32xf32> to vector<32xf32>
    %cst_59 = arith.constant dense<0.000000e+00> : vector<16xf32>
    %183 = vector.multi_reduction <add>, %178, %cst_59 [1] : vector<16x32xf32> to vector<16xf32>
    %184 = vector.shape_cast %183 : vector<16xf32> to vector<16x1xf32>
    %cst_60 = arith.constant 3.200000e+01 : f32
    %185 = vector.broadcast %cst_60 : f32 to vector<16x1xf32>
    %186 = arith.divf %184, %185 : vector<16x1xf32>
    %187 = vector.broadcast %186 : vector<16x1xf32> to vector<16x32xf32>
    %188 = arith.subf %178, %187 : vector<16x32xf32>
    %189 = arith.mulf %188, %188 : vector<16x32xf32>
    %cst_61 = arith.constant dense<0.000000e+00> : vector<16xf32>
    %190 = vector.multi_reduction <add>, %189, %cst_61 [1] : vector<16x32xf32> to vector<16xf32>
    %191 = vector.shape_cast %190 : vector<16xf32> to vector<16x1xf32>
    %cst_62 = arith.constant 3.200000e+01 : f32
    %192 = vector.broadcast %cst_62 : f32 to vector<16x1xf32>
    %193 = arith.divf %191, %192 : vector<16x1xf32>
    %194 = vector.broadcast %186 : vector<16x1xf32> to vector<16x32xf32>
    %195 = arith.subf %178, %194 : vector<16x32xf32>
    %cst_63 = arith.constant 9.99999996E-13 : f32
    %196 = vector.broadcast %cst_63 : f32 to vector<16x1xf32>
    %197 = arith.addf %193, %196 : vector<16x1xf32>
    %198 = math.rsqrt %197 : vector<16x1xf32>
    %199 = vector.broadcast %198 : vector<16x1xf32> to vector<16x32xf32>
    %200 = arith.mulf %195, %199 : vector<16x32xf32>
    %201 = vector.shape_cast %180 : vector<32xf32> to vector<1x32xf32>
    %202 = vector.broadcast %201 : vector<1x32xf32> to vector<16x32xf32>
    %203 = arith.mulf %200, %202 : vector<16x32xf32>
    %204 = vector.shape_cast %182 : vector<32xf32> to vector<1x32xf32>
    %205 = vector.broadcast %204 : vector<1x32xf32> to vector<16x32xf32>
    %206 = arith.addf %203, %205 : vector<16x32xf32>
    %c1_64 = arith.constant 1 : index
    %c0_65 = arith.constant 0 : index
    %c0_66 = arith.constant 0 : index
    %207 = vector.load %arg10[%c1_64, %c0_65, %c0_66] : memref<2x4x96xf32, #tpu.memory_space<vmem>>, vector<1x4x96xf32>
    %208 = vector.shape_cast %207 : vector<1x4x96xf32> to vector<4x96xf32>
    %c1_67 = arith.constant 1 : index
    %c0_68 = arith.constant 0 : index
    %c0_69 = arith.constant 0 : index
    %209 = vector.load %arg11[%c1_67, %c0_68, %c0_69] : memref<2x4x32xf32, #tpu.memory_space<vmem>>, vector<1x4x32xf32>
    %210 = vector.shape_cast %209 : vector<1x4x32xf32> to vector<4x32xf32>
    %c1_70 = arith.constant 1 : index
    %c0_71 = arith.constant 0 : index
    %c0_72 = arith.constant 0 : index
    %211 = vector.load %arg7[%c1_70, %c0_71, %c0_72] : memref<2x32x32xbf16, #tpu.memory_space<vmem>>, vector<1x32x32xbf16>
    %212 = vector.shape_cast %211 : vector<1x32x32xbf16> to vector<32x32xbf16>
    %213 = arith.truncf %206 : vector<16x32xf32> to vector<16x32xbf16>
    %c1_73 = arith.constant 1 : index
    %c0_74 = arith.constant 0 : index
    %c0_75 = arith.constant 0 : index
    %214 = vector.load %arg6[%c1_73, %c0_74, %c0_75] : memref<2x32x96xbf16, #tpu.memory_space<vmem>>, vector<1x32x96xbf16>
    %215 = vector.shape_cast %214 : vector<1x32x96xbf16> to vector<32x96xbf16>
    %cst_76 = arith.constant dense<0.000000e+00> : vector<16x96xf32>
    %216 = tpu.matmul %213, %215, %cst_76 {dimension_numbers = #tpu.dot_dimension_numbers<[1], [0], [0], [1], [0, 0, 1, 1], [], []>} : vector<16x32xbf16>, vector<32x96xbf16>, vector<16x96xf32> -> vector<16x96xf32>
    %217 = vector.extract_strided_slice %208 {offsets = [0, 0], sizes = [1, 96], strides = [1, 1]} : vector<4x96xf32> to vector<1x96xf32>
    %218 = vector.shape_cast %217 : vector<1x96xf32> to vector<96xf32>
    %219 = vector.shape_cast %218 : vector<96xf32> to vector<1x96xf32>
    %220 = vector.broadcast %219 : vector<1x96xf32> to vector<16x96xf32>
    %221 = arith.addf %216, %220 : vector<16x96xf32>
    %222 = vector.shape_cast %221 : vector<16x96xf32> to vector<2x8x96xf32>
    %223 = vector.extract_strided_slice %222 {offsets = [0, 0, 0], sizes = [2, 8, 16], strides = [1, 1, 1]} : vector<2x8x96xf32> to vector<2x8x16xf32>
    %224 = arith.truncf %223 : vector<2x8x16xf32> to vector<2x8x16xbf16>
    %225 = vector.extract_strided_slice %222 {offsets = [0, 0, 16], sizes = [2, 8, 16], strides = [1, 1, 1]} : vector<2x8x96xf32> to vector<2x8x16xf32>
    %226 = arith.truncf %225 : vector<2x8x16xf32> to vector<2x8x16xbf16>
    %227 = vector.extract_strided_slice %222 {offsets = [0, 0, 32], sizes = [2, 8, 16], strides = [1, 1, 1]} : vector<2x8x96xf32> to vector<2x8x16xf32>
    %228 = arith.truncf %227 : vector<2x8x16xf32> to vector<2x8x16xbf16>
    %cst_77 = arith.constant dense<0.000000e+00> : vector<2x8x8xf32>
    %229 = tpu.matmul %224, %226, %cst_77 {dimension_numbers = #tpu.dot_dimension_numbers<[2], [2], [1], [1], [0, 0, 0, 1, 1, 1], [0], [0]>} : vector<2x8x16xbf16>, vector<2x8x16xbf16>, vector<2x8x8xf32> -> vector<2x8x8xf32>
    %230 = arith.addf %229, %47 : vector<2x8x8xf32>
    %cst_78 = arith.constant dense<0xFF800000> : vector<2x8xf32>
    %231 = vector.multi_reduction <maximumf>, %230, %cst_78 [2] : vector<2x8x8xf32> to vector<2x8xf32>
    %232 = vector.shape_cast %231 : vector<2x8xf32> to vector<2x8x1xf32>
    %233 = vector.broadcast %232 : vector<2x8x1xf32> to vector<2x8x8xf32>
    %234 = arith.subf %230, %233 : vector<2x8x8xf32>
    %235 = math.exp %234 : vector<2x8x8xf32>
    %cst_79 = arith.constant dense<0.000000e+00> : vector<2x8xf32>
    %236 = vector.multi_reduction <add>, %235, %cst_79 [2] : vector<2x8x8xf32> to vector<2x8xf32>
    %237 = vector.shape_cast %236 : vector<2x8xf32> to vector<2x8x1xf32>
    %238 = tpu.reciprocal %237 {approx = true} : vector<2x8x1xf32> -> vector<2x8x1xf32>
    %239 = vector.broadcast %238 : vector<2x8x1xf32> to vector<2x8x8xf32>
    %240 = arith.mulf %235, %239 : vector<2x8x8xf32>
    %241 = arith.truncf %240 : vector<2x8x8xf32> to vector<2x8x8xbf16>
    %cst_80 = arith.constant dense<0.000000e+00> : vector<2x8x16xf32>
    %242 = tpu.matmul %241, %228, %cst_80 {dimension_numbers = #tpu.dot_dimension_numbers<[2], [1], [1], [2], [0, 0, 0, 1, 1, 2], [0], [0]>} : vector<2x8x8xbf16>, vector<2x8x16xbf16>, vector<2x8x16xf32> -> vector<2x8x16xf32>
    %243 = vector.shape_cast %242 : vector<2x8x16xf32> to vector<16x16xf32>
    %244 = arith.truncf %243 : vector<16x16xf32> to vector<16x16xbf16>
    %245 = vector.extract_strided_slice %212 {offsets = [0, 0], sizes = [16, 32], strides = [1, 1]} : vector<32x32xbf16> to vector<16x32xbf16>
    %cst_81 = arith.constant dense<0.000000e+00> : vector<16x32xf32>
    %246 = tpu.matmul %244, %245, %cst_81 {dimension_numbers = #tpu.dot_dimension_numbers<[1], [0], [0], [1], [0, 0, 1, 1], [], []>} : vector<16x16xbf16>, vector<16x32xbf16>, vector<16x32xf32> -> vector<16x32xf32>
    %247 = vector.extract_strided_slice %222 {offsets = [0, 0, 48], sizes = [2, 8, 16], strides = [1, 1, 1]} : vector<2x8x96xf32> to vector<2x8x16xf32>
    %248 = arith.truncf %247 : vector<2x8x16xf32> to vector<2x8x16xbf16>
    %249 = vector.extract_strided_slice %222 {offsets = [0, 0, 64], sizes = [2, 8, 16], strides = [1, 1, 1]} : vector<2x8x96xf32> to vector<2x8x16xf32>
    %250 = arith.truncf %249 : vector<2x8x16xf32> to vector<2x8x16xbf16>
    %251 = vector.extract_strided_slice %222 {offsets = [0, 0, 80], sizes = [2, 8, 16], strides = [1, 1, 1]} : vector<2x8x96xf32> to vector<2x8x16xf32>
    %252 = arith.truncf %251 : vector<2x8x16xf32> to vector<2x8x16xbf16>
    %cst_82 = arith.constant dense<0.000000e+00> : vector<2x8x8xf32>
    %253 = tpu.matmul %248, %250, %cst_82 {dimension_numbers = #tpu.dot_dimension_numbers<[2], [2], [1], [1], [0, 0, 0, 1, 1, 1], [0], [0]>} : vector<2x8x16xbf16>, vector<2x8x16xbf16>, vector<2x8x8xf32> -> vector<2x8x8xf32>
    %254 = arith.addf %253, %47 : vector<2x8x8xf32>
    %cst_83 = arith.constant dense<0xFF800000> : vector<2x8xf32>
    %255 = vector.multi_reduction <maximumf>, %254, %cst_83 [2] : vector<2x8x8xf32> to vector<2x8xf32>
    %256 = vector.shape_cast %255 : vector<2x8xf32> to vector<2x8x1xf32>
    %257 = vector.broadcast %256 : vector<2x8x1xf32> to vector<2x8x8xf32>
    %258 = arith.subf %254, %257 : vector<2x8x8xf32>
    %259 = math.exp %258 : vector<2x8x8xf32>
    %cst_84 = arith.constant dense<0.000000e+00> : vector<2x8xf32>
    %260 = vector.multi_reduction <add>, %259, %cst_84 [2] : vector<2x8x8xf32> to vector<2x8xf32>
    %261 = vector.shape_cast %260 : vector<2x8xf32> to vector<2x8x1xf32>
    %262 = tpu.reciprocal %261 {approx = true} : vector<2x8x1xf32> -> vector<2x8x1xf32>
    %263 = vector.broadcast %262 : vector<2x8x1xf32> to vector<2x8x8xf32>
    %264 = arith.mulf %259, %263 : vector<2x8x8xf32>
    %265 = arith.truncf %264 : vector<2x8x8xf32> to vector<2x8x8xbf16>
    %cst_85 = arith.constant dense<0.000000e+00> : vector<2x8x16xf32>
    %266 = tpu.matmul %265, %252, %cst_85 {dimension_numbers = #tpu.dot_dimension_numbers<[2], [1], [1], [2], [0, 0, 0, 1, 1, 2], [0], [0]>} : vector<2x8x8xbf16>, vector<2x8x16xbf16>, vector<2x8x16xf32> -> vector<2x8x16xf32>
    %267 = vector.shape_cast %266 : vector<2x8x16xf32> to vector<16x16xf32>
    %268 = arith.truncf %267 : vector<16x16xf32> to vector<16x16xbf16>
    %269 = vector.extract_strided_slice %212 {offsets = [16, 0], sizes = [16, 32], strides = [1, 1]} : vector<32x32xbf16> to vector<16x32xbf16>
    %cst_86 = arith.constant dense<0.000000e+00> : vector<16x32xf32>
    %270 = tpu.matmul %268, %269, %cst_86 {dimension_numbers = #tpu.dot_dimension_numbers<[1], [0], [0], [1], [0, 0, 1, 1], [], []>} : vector<16x16xbf16>, vector<16x32xbf16>, vector<16x32xf32> -> vector<16x32xf32>
    %271 = arith.addf %246, %270 : vector<16x32xf32>
    %272 = arith.addf %206, %271 : vector<16x32xf32>
    %273 = vector.extract_strided_slice %208 {offsets = [1, 0], sizes = [1, 32], strides = [1, 1]} : vector<4x96xf32> to vector<1x32xf32>
    %274 = vector.shape_cast %273 : vector<1x32xf32> to vector<32xf32>
    %275 = vector.shape_cast %274 : vector<32xf32> to vector<1x32xf32>
    %276 = vector.broadcast %275 : vector<1x32xf32> to vector<16x32xf32>
    %277 = arith.addf %272, %276 : vector<16x32xf32>
    %278 = vector.extract_strided_slice %210 {offsets = [0, 0], sizes = [1, 32], strides = [1, 1]} : vector<4x32xf32> to vector<1x32xf32>
    %279 = vector.shape_cast %278 : vector<1x32xf32> to vector<32xf32>
    %280 = vector.extract_strided_slice %210 {offsets = [1, 0], sizes = [1, 32], strides = [1, 1]} : vector<4x32xf32> to vector<1x32xf32>
    %281 = vector.shape_cast %280 : vector<1x32xf32> to vector<32xf32>
    %cst_87 = arith.constant dense<0.000000e+00> : vector<16xf32>
    %282 = vector.multi_reduction <add>, %277, %cst_87 [1] : vector<16x32xf32> to vector<16xf32>
    %283 = vector.shape_cast %282 : vector<16xf32> to vector<16x1xf32>
    %cst_88 = arith.constant 3.200000e+01 : f32
    %284 = vector.broadcast %cst_88 : f32 to vector<16x1xf32>
    %285 = arith.divf %283, %284 : vector<16x1xf32>
    %286 = vector.broadcast %285 : vector<16x1xf32> to vector<16x32xf32>
    %287 = arith.subf %277, %286 : vector<16x32xf32>
    %288 = arith.mulf %287, %287 : vector<16x32xf32>
    %cst_89 = arith.constant dense<0.000000e+00> : vector<16xf32>
    %289 = vector.multi_reduction <add>, %288, %cst_89 [1] : vector<16x32xf32> to vector<16xf32>
    %290 = vector.shape_cast %289 : vector<16xf32> to vector<16x1xf32>
    %cst_90 = arith.constant 3.200000e+01 : f32
    %291 = vector.broadcast %cst_90 : f32 to vector<16x1xf32>
    %292 = arith.divf %290, %291 : vector<16x1xf32>
    %293 = vector.broadcast %285 : vector<16x1xf32> to vector<16x32xf32>
    %294 = arith.subf %277, %293 : vector<16x32xf32>
    %cst_91 = arith.constant 9.99999996E-13 : f32
    %295 = vector.broadcast %cst_91 : f32 to vector<16x1xf32>
    %296 = arith.addf %292, %295 : vector<16x1xf32>
    %297 = math.rsqrt %296 : vector<16x1xf32>
    %298 = vector.broadcast %297 : vector<16x1xf32> to vector<16x32xf32>
    %299 = arith.mulf %294, %298 : vector<16x32xf32>
    %300 = vector.shape_cast %279 : vector<32xf32> to vector<1x32xf32>
    %301 = vector.broadcast %300 : vector<1x32xf32> to vector<16x32xf32>
    %302 = arith.mulf %299, %301 : vector<16x32xf32>
    %303 = vector.shape_cast %281 : vector<32xf32> to vector<1x32xf32>
    %304 = vector.broadcast %303 : vector<1x32xf32> to vector<16x32xf32>
    %305 = arith.addf %302, %304 : vector<16x32xf32>
    %306 = arith.truncf %305 : vector<16x32xf32> to vector<16x32xbf16>
    %c1_92 = arith.constant 1 : index
    %c0_93 = arith.constant 0 : index
    %c0_94 = arith.constant 0 : index
    %307 = vector.load %arg8[%c1_92, %c0_93, %c0_94] : memref<2x32x64xbf16, #tpu.memory_space<vmem>>, vector<1x32x64xbf16>
    %308 = vector.shape_cast %307 : vector<1x32x64xbf16> to vector<32x64xbf16>
    %cst_95 = arith.constant dense<0.000000e+00> : vector<16x64xf32>
    %309 = tpu.matmul %306, %308, %cst_95 {dimension_numbers = #tpu.dot_dimension_numbers<[1], [0], [0], [1], [0, 0, 1, 1], [], []>} : vector<16x32xbf16>, vector<32x64xbf16>, vector<16x64xf32> -> vector<16x64xf32>
    %310 = vector.extract_strided_slice %208 {offsets = [2, 0], sizes = [1, 64], strides = [1, 1]} : vector<4x96xf32> to vector<1x64xf32>
    %311 = vector.shape_cast %310 : vector<1x64xf32> to vector<64xf32>
    %312 = vector.shape_cast %311 : vector<64xf32> to vector<1x64xf32>
    %313 = vector.broadcast %312 : vector<1x64xf32> to vector<16x64xf32>
    %314 = arith.addf %309, %313 : vector<16x64xf32>
    %cst_96 = arith.constant 5.000000e-01 : f32
    %315 = vector.broadcast %cst_96 : f32 to vector<16x64xf32>
    %316 = arith.mulf %315, %314 : vector<16x64xf32>
    %cst_97 = arith.constant 4.471500e-02 : f32
    %317 = vector.broadcast %cst_97 : f32 to vector<16x64xf32>
    %318 = arith.mulf %317, %314 : vector<16x64xf32>
    %319 = arith.mulf %318, %314 : vector<16x64xf32>
    %320 = arith.mulf %319, %314 : vector<16x64xf32>
    %321 = arith.addf %314, %320 : vector<16x64xf32>
    %cst_98 = arith.constant 0.797884583 : f32
    %322 = vector.broadcast %cst_98 : f32 to vector<16x64xf32>
    %323 = arith.mulf %322, %321 : vector<16x64xf32>
    %324 = math.tanh %323 : vector<16x64xf32>
    %cst_99 = arith.constant 1.000000e+00 : f32
    %325 = vector.broadcast %cst_99 : f32 to vector<16x64xf32>
    %326 = arith.addf %325, %324 : vector<16x64xf32>
    %327 = arith.mulf %316, %326 : vector<16x64xf32>
    %328 = arith.truncf %327 : vector<16x64xf32> to vector<16x64xbf16>
    %c1_100 = arith.constant 1 : index
    %c0_101 = arith.constant 0 : index
    %c0_102 = arith.constant 0 : index
    %329 = vector.load %arg9[%c1_100, %c0_101, %c0_102] : memref<2x64x32xbf16, #tpu.memory_space<vmem>>, vector<1x64x32xbf16>
    %330 = vector.shape_cast %329 : vector<1x64x32xbf16> to vector<64x32xbf16>
    %cst_103 = arith.constant dense<0.000000e+00> : vector<16x32xf32>
    %331 = tpu.matmul %328, %330, %cst_103 {dimension_numbers = #tpu.dot_dimension_numbers<[1], [0], [0], [1], [0, 0, 1, 1], [], []>} : vector<16x64xbf16>, vector<64x32xbf16>, vector<16x32xf32> -> vector<16x32xf32>
    %332 = vector.extract_strided_slice %208 {offsets = [3, 0], sizes = [1, 32], strides = [1, 1]} : vector<4x96xf32> to vector<1x32xf32>
    %333 = vector.shape_cast %332 : vector<1x32xf32> to vector<32xf32>
    %334 = vector.shape_cast %333 : vector<32xf32> to vector<1x32xf32>
    %335 = vector.broadcast %334 : vector<1x32xf32> to vector<16x32xf32>
    %336 = arith.addf %331, %335 : vector<16x32xf32>
    %337 = arith.addf %305, %336 : vector<16x32xf32>
    %338 = vector.extract_strided_slice %210 {offsets = [2, 0], sizes = [1, 32], strides = [1, 1]} : vector<4x32xf32> to vector<1x32xf32>
    %339 = vector.shape_cast %338 : vector<1x32xf32> to vector<32xf32>
    %340 = vector.extract_strided_slice %210 {offsets = [3, 0], sizes = [1, 32], strides = [1, 1]} : vector<4x32xf32> to vector<1x32xf32>
    %341 = vector.shape_cast %340 : vector<1x32xf32> to vector<32xf32>
    %cst_104 = arith.constant dense<0.000000e+00> : vector<16xf32>
    %342 = vector.multi_reduction <add>, %337, %cst_104 [1] : vector<16x32xf32> to vector<16xf32>
    %343 = vector.shape_cast %342 : vector<16xf32> to vector<16x1xf32>
    %cst_105 = arith.constant 3.200000e+01 : f32
    %344 = vector.broadcast %cst_105 : f32 to vector<16x1xf32>
    %345 = arith.divf %343, %344 : vector<16x1xf32>
    %346 = vector.broadcast %345 : vector<16x1xf32> to vector<16x32xf32>
    %347 = arith.subf %337, %346 : vector<16x32xf32>
    %348 = arith.mulf %347, %347 : vector<16x32xf32>
    %cst_106 = arith.constant dense<0.000000e+00> : vector<16xf32>
    %349 = vector.multi_reduction <add>, %348, %cst_106 [1] : vector<16x32xf32> to vector<16xf32>
    %350 = vector.shape_cast %349 : vector<16xf32> to vector<16x1xf32>
    %cst_107 = arith.constant 3.200000e+01 : f32
    %351 = vector.broadcast %cst_107 : f32 to vector<16x1xf32>
    %352 = arith.divf %350, %351 : vector<16x1xf32>
    %353 = vector.broadcast %345 : vector<16x1xf32> to vector<16x32xf32>
    %354 = arith.subf %337, %353 : vector<16x32xf32>
    %cst_108 = arith.constant 9.99999996E-13 : f32
    %355 = vector.broadcast %cst_108 : f32 to vector<16x1xf32>
    %356 = arith.addf %352, %355 : vector<16x1xf32>
    %357 = math.rsqrt %356 : vector<16x1xf32>
    %358 = vector.broadcast %357 : vector<16x1xf32> to vector<16x32xf32>
    %359 = arith.mulf %354, %358 : vector<16x32xf32>
    %360 = vector.shape_cast %339 : vector<32xf32> to vector<1x32xf32>
    %361 = vector.broadcast %360 : vector<1x32xf32> to vector<16x32xf32>
    %362 = arith.mulf %359, %361 : vector<16x32xf32>
    %363 = vector.shape_cast %341 : vector<32xf32> to vector<1x32xf32>
    %364 = vector.broadcast %363 : vector<1x32xf32> to vector<16x32xf32>
    %365 = arith.addf %362, %364 : vector<16x32xf32>
    %366 = vector.shape_cast %365 : vector<16x32xf32> to vector<2x8x32xf32>
    %367 = vector.extract_strided_slice %366 {offsets = [0, 0, 0], sizes = [2, 1, 32], strides = [1, 1, 1]} : vector<2x8x32xf32> to vector<2x1x32xf32>
    %368 = vector.shape_cast %367 : vector<2x1x32xf32> to vector<2x32xf32>
    %369 = arith.mulf %368, %368 : vector<2x32xf32>
    %cst_109 = arith.constant dense<0.000000e+00> : vector<2xf32>
    %370 = vector.multi_reduction <add>, %369, %cst_109 [1] : vector<2x32xf32> to vector<2xf32>
    %371 = vector.shape_cast %370 : vector<2xf32> to vector<2x1xf32>
    %cst_110 = arith.constant 1.000000e-24 : f32
    %372 = vector.broadcast %cst_110 : f32 to vector<2x1xf32>
    %373 = arith.maximumf %371, %372 : vector<2x1xf32>
    %374 = math.rsqrt %373 : vector<2x1xf32>
    %375 = vector.broadcast %374 : vector<2x1xf32> to vector<2x32xf32>
    %376 = arith.mulf %368, %375 : vector<2x32xf32>
    %c0_111 = arith.constant 0 : index
    %c0_112 = arith.constant 0 : index
    %377 = vector.load %arg12[%c0_111, %c0_112] : memref<2x32xf32, #tpu.memory_space<vmem>>, vector<2x32xf32>
    tpu.vector_store %arg12[%c0_111, %c0_112], %376 {strides = array<i32>} : memref<2x32xf32, #tpu.memory_space<vmem>>, vector<2x32xf32>,
    return
  }
  func.func @transform_0(%arg0: i32) -> (i32, i32, i32) {
    %c0_i32 = arith.constant 0 : i32
    %c0_i32_0 = arith.constant 0 : i32
    %c0_i32_1 = arith.constant 0 : i32
    return %arg0, %c0_i32, %c0_i32_0 : i32, i32, i32
  }
  func.func @transform_1(%arg0: i32) -> (i32, i32, i32) {
    %c0_i32 = arith.constant 0 : i32
    %c0_i32_0 = arith.constant 0 : i32
    %c0_i32_1 = arith.constant 0 : i32
    return %arg0, %c0_i32, %c0_i32_0 : i32, i32, i32
  }
  func.func @transform_2(%arg0: i32) -> (i32, i32) {
    %c0_i32 = arith.constant 0 : i32
    %c0_i32_0 = arith.constant 0 : i32
    %c0_i32_1 = arith.constant 0 : i32
    return %c0_i32, %c0_i32_0 : i32, i32
  }
  func.func @transform_3(%arg0: i32) -> (i32, i32) {
    %c0_i32 = arith.constant 0 : i32
    %c0_i32_0 = arith.constant 0 : i32
    %c0_i32_1 = arith.constant 0 : i32
    return %c0_i32, %c0_i32_0 : i32, i32
  }
  func.func @transform_4(%arg0: i32) -> (i32, i32) {
    %c0_i32 = arith.constant 0 : i32
    %c0_i32_0 = arith.constant 0 : i32
    %c0_i32_1 = arith.constant 0 : i32
    return %c0_i32, %c0_i32_0 : i32, i32
  }
  func.func @transform_5(%arg0: i32) -> (i32, i32, i32) {
    %c0_i32 = arith.constant 0 : i32
    %c0_i32_0 = arith.constant 0 : i32
    %c0_i32_1 = arith.constant 0 : i32
    %c0_i32_2 = arith.constant 0 : i32
    return %c0_i32, %c0_i32_0, %c0_i32_1 : i32, i32, i32
  }
  func.func @transform_6(%arg0: i32) -> (i32, i32, i32) {
    %c0_i32 = arith.constant 0 : i32
    %c0_i32_0 = arith.constant 0 : i32
    %c0_i32_1 = arith.constant 0 : i32
    %c0_i32_2 = arith.constant 0 : i32
    return %c0_i32, %c0_i32_0, %c0_i32_1 : i32, i32, i32
  }
  func.func @transform_7(%arg0: i32) -> (i32, i32, i32) {
    %c0_i32 = arith.constant 0 : i32
    %c0_i32_0 = arith.constant 0 : i32
    %c0_i32_1 = arith.constant 0 : i32
    %c0_i32_2 = arith.constant 0 : i32
    return %c0_i32, %c0_i32_0, %c0_i32_1 : i32, i32, i32
  }
  func.func @transform_8(%arg0: i32) -> (i32, i32, i32) {
    %c0_i32 = arith.constant 0 : i32
    %c0_i32_0 = arith.constant 0 : i32
    %c0_i32_1 = arith.constant 0 : i32
    %c0_i32_2 = arith.constant 0 : i32
    return %c0_i32, %c0_i32_0, %c0_i32_1 : i32, i32, i32
  }
  func.func @transform_9(%arg0: i32) -> (i32, i32, i32) {
    %c0_i32 = arith.constant 0 : i32
    %c0_i32_0 = arith.constant 0 : i32
    %c0_i32_1 = arith.constant 0 : i32
    %c0_i32_2 = arith.constant 0 : i32
    return %c0_i32, %c0_i32_0, %c0_i32_1 : i32, i32, i32
  }
  func.func @transform_10(%arg0: i32) -> (i32, i32, i32) {
    %c0_i32 = arith.constant 0 : i32
    %c0_i32_0 = arith.constant 0 : i32
    %c0_i32_1 = arith.constant 0 : i32
    %c0_i32_2 = arith.constant 0 : i32
    return %c0_i32, %c0_i32_0, %c0_i32_1 : i32, i32, i32
  }
  func.func @transform_11(%arg0: i32) -> (i32, i32) {
    %c0_i32 = arith.constant 0 : i32
    %c0_i32_0 = arith.constant 0 : i32
    return %arg0, %c0_i32 : i32, i32
  }
}

</mosaic_0001>

<llo_original>
// kernel: tpu_custom_call.1
$region0: #{tpu_custom_call.1}
  #allocation0 [shape = 'u32[]', space=smem, size = 0x4, offset = 0x4, fixed_abs, tag = 'smem constant byte address 0x4 - core index']
  #allocation1 [shape = 'u32[144,128]{1,0:T(1,128)}', space=vmem, size = 0x12000, scoped, tag = 'internal scratch']
  %s0 = inlined_call_operand.vmem [shape: s32[2,8,1], index: 0, kind: input, shape index: {}]
  %s1 = inlined_call_operand.vmem [shape: f32[2,1,8], index: 1, kind: input, shape index: {}]
  %s2 = inlined_call_operand.vmem [shape: f32[128,32], index: 2, kind: input, shape index: {}]
  %s3 = inlined_call_operand.vmem [shape: f32[8,32], index: 3, kind: input, shape index: {}]
  %s4 = inlined_call_operand.vmem [shape: f32[2,32], index: 4, kind: input, shape index: {}]
  %s5 = inlined_call_operand.vmem [shape: bf16[2,32,96], index: 5, kind: input, shape index: {}]
  %s6 = inlined_call_operand.vmem [shape: bf16[2,32,32], index: 6, kind: input, shape index: {}]
  %s7 = inlined_call_operand.vmem [shape: bf16[2,32,64], index: 7, kind: input, shape index: {}]
  %s8 = inlined_call_operand.vmem [shape: bf16[2,64,32], index: 8, kind: input, shape index: {}]
  %s9 = inlined_call_operand.vmem [shape: f32[2,4,96], index: 9, kind: input, shape index: {}]
  %s10 = inlined_call_operand.vmem [shape: f32[2,4,32], index: 10, kind: input, shape index: {}]
  %s11 = inlined_call_operand.hbm [shape: f32[2,32], index: 11, kind: output, shape index: {}]
  %s12 = sld [smem:[#allocation0]]
  $region54: #{tpu_custom_call.1} parent=0
    _
  %s14 = ssub.s32 1, %s12
  %s15 = scalar_select 0, %s14, %s12
  $region1: #{tpu_custom_call.1} parent=0
    #allocation2 [shape = 'u8[1024]{0}', space=vmem, size = 0x400, scoped, tag = 'output window, operand 0, single buffered']
    #allocation3 [shape = 's32[1]{0}', space=sflag, size = 0x4, scoped, tag = 'scoped memory for tpu_custom_call.1']
    %16 = vsyncpa [#allocation3], 0
    // Predicated region
    $region2: #{tpu_custom_call.1} parent=1 // pred_check
      _
    $region3: #{tpu_custom_call.1} parent=1 // pred_check_branch
      %18 = sbr.rel (0) target = $region5
    $region4: #{tpu_custom_call.1} parent=1 // pred_region
      _
    $region5: #{tpu_custom_call.1} parent=1 // pred_fallthru
      _
    // Predicated region
    $region6: #{tpu_custom_call.1} parent=1 // pred_check
      _
    $region7: #{tpu_custom_call.1} parent=1 // pred_check_branch
      %20 = sbr.rel (0) target = $region9
    $region8: #{tpu_custom_call.1} parent=1 // pred_region
      _
    $region9: #{tpu_custom_call.1} parent=1 // pred_fallthru
      _
    // Predicated region
    $region10: #{tpu_custom_call.1} parent=1 // pred_check
      _
    $region11: #{tpu_custom_call.1} parent=1 // pred_check_branch
      %22 = sbr.rel (0) target = $region13
    $region12: #{tpu_custom_call.1} parent=1 // pred_region
      _
    $region13: #{tpu_custom_call.1} parent=1 // pred_fallthru
      _
    // Predicated region
    $region14: #{tpu_custom_call.1} parent=1 // pred_check
      _
    $region15: #{tpu_custom_call.1} parent=1 // pred_check_branch
      %24 = sbr.rel (0) target = $region17
    $region16: #{tpu_custom_call.1} parent=1 // pred_region
      _
    $region17: #{tpu_custom_call.1} parent=1 // pred_fallthru
      _
    // Predicated region
    $region18: #{tpu_custom_call.1} parent=1 // pred_check
      _
    $region19: #{tpu_custom_call.1} parent=1 // pred_check_branch
      %26 = sbr.rel (0) target = $region21
    $region20: #{tpu_custom_call.1} parent=1 // pred_region
      _
    $region21: #{tpu_custom_call.1} parent=1 // pred_fallthru
      _
    // Predicated region
    $region22: #{tpu_custom_call.1} parent=1 // pred_check
      _
    $region23: #{tpu_custom_call.1} parent=1 // pred_check_branch
      %28 = sbr.rel (0) target = $region25
    $region24: #{tpu_custom_call.1} parent=1 // pred_region
      _
    $region25: #{tpu_custom_call.1} parent=1 // pred_fallthru
      _
    // Predicated region
    $region26: #{tpu_custom_call.1} parent=1 // pred_check
      _
    $region27: #{tpu_custom_call.1} parent=1 // pred_check_branch
      %30 = sbr.rel (0) target = $region29
    $region28: #{tpu_custom_call.1} parent=1 // pred_region
      _
    $region29: #{tpu_custom_call.1} parent=1 // pred_fallthru
      _
    // Predicated region
    $region30: #{tpu_custom_call.1} parent=1 // pred_check
      _
    $region31: #{tpu_custom_call.1} parent=1 // pred_check_branch
      %32 = sbr.rel (0) target = $region33
    $region32: #{tpu_custom_call.1} parent=1 // pred_region
      _
    $region33: #{tpu_custom_call.1} parent=1 // pred_fallthru
      _
    // Predicated region
    $region34: #{tpu_custom_call.1} parent=1 // pred_check
      _
    $region35: #{tpu_custom_call.1} parent=1 // pred_check_branch
      %34 = sbr.rel (0) target = $region37
    $region36: #{tpu_custom_call.1} parent=1 // pred_region
      _
    $region37: #{tpu_custom_call.1} parent=1 // pred_fallthru
      _
    // Predicated region
    $region38: #{tpu_custom_call.1} parent=1 // pred_check
      _
    $region39: #{tpu_custom_call.1} parent=1 // pred_check_branch
      %36 = sbr.rel (0) target = $region41
    $region40: #{tpu_custom_call.1} parent=1 // pred_region
      _
    $region41: #{tpu_custom_call.1} parent=1 // pred_fallthru
      _
    // Predicated region
    $region42: #{tpu_custom_call.1} parent=1 // pred_check
      _
    $region43: #{tpu_custom_call.1} parent=1 // pred_check_branch
      %38 = sbr.rel (0) target = $region45
    $region44: #{tpu_custom_call.1} parent=1 // pred_region
      _
    $region45: #{tpu_custom_call.1} parent=1 // pred_fallthru
      _
    %v40 = vlaneseq
    %v41 = vand.u32 %v40, 127
    %v42 = vld [vmem:[%s0] sm:$0xff]
    %v43 = vld [vmem:[%s0 + $0x8] sm:$0xff]
    %44 = vset.pattern.permute.xlu0 0
    %45 = vperm.xlu0 %44, %v42
    %v46 = vpop.permute.xlu0 %45
    %47 = vset.pattern.permute.xlu0 0
    %48 = vperm.xlu0 %47, %v43
    %v49 = vpop.permute.xlu0 %48
    %vm50 = vcmp.eq.s32.totalorder %v41, %v46
    %vm51 = vcmp.eq.s32.totalorder %v41, %v49
    %v52 = vsel %vm50, 1, 0
    %v53 = vsel %vm51, 1, 0
    %v54 = vcvt.s32.f32 %v52
    %v55 = vcvt.s32.f32 %v53
    %v56 = vld [vmem:[%s2] sm:$0xff]
    %v57 = vld [vmem:[%s2 + $0x8] sm:$0xff]
    %v58 = vld [vmem:[%s2 + $0x10] sm:$0xff]
    %v59 = vld [vmem:[%s2 + $0x18] sm:$0xff]
    %v60 = vld [vmem:[%s2 + $0x20] sm:$0xff]
    %v61 = vld [vmem:[%s2 + $0x28] sm:$0xff]
    %v62 = vld [vmem:[%s2 + $0x30] sm:$0xff]
    %v63 = vld [vmem:[%s2 + $0x38] sm:$0xff]
    %v64 = vld [vmem:[%s2 + $0x40] sm:$0xff]
    %v65 = vld [vmem:[%s2 + $0x48] sm:$0xff]
    %v66 = vld [vmem:[%s2 + $0x50] sm:$0xff]
    %v67 = vld [vmem:[%s2 + $0x58] sm:$0xff]
    %v68 = vld [vmem:[%s2 + $0x60] sm:$0xff]
    %v69 = vld [vmem:[%s2 + $0x68] sm:$0xff]
    %v70 = vld [vmem:[%s2 + $0x70] sm:$0xff]
    %v71 = vld [vmem:[%s2 + $0x78] sm:$0xff]
    %v72 = vld [vmem:[%s3] sm:$0xff]
    %73 = vmatprep.subr.mxu0 0.0
    %74 = vmatpush1.msra.mxu0 %v56
    %75 = vmatprep.subr.mxu0 0.0
    %76 = vmatpush1.msra.mxu0 %v57
    %77 = vmatprep.subr.mxu0 0.0
    %78 = vmatpush1.msra.mxu0 %v58
    %79 = vmatprep.subr.mxu0 0.0
    %80 = vmatpush1.msra.mxu0 %v59
    %81 = vmatprep.subr.mxu0 0.0
    %82 = vmatpush1.msra.mxu0 %v60
    %83 = vmatprep.subr.mxu0 0.0
    %84 = vmatpush1.msra.mxu0 %v61
    %85 = vmatprep.subr.mxu0 0.0
    %86 = vmatpush1.msra.mxu0 %v62
    %87 = vmatprep.subr.mxu0 0.0
    %88 = vmatpush1.msra.mxu0 %v63
    %89 = vmatprep.subr.mxu0 0.0
    %90 = vmatpush1.msra.mxu0 %v64
    %91 = vmatprep.subr.mxu0 0.0
    %92 = vmatpush1.msra.mxu0 %v65
    %93 = vmatprep.subr.mxu0 0.0
    %94 = vmatpush1.msra.mxu0 %v66
    %95 = vmatprep.subr.mxu0 0.0
    %96 = vmatpush1.msra.mxu0 %v67
    %97 = vmatprep.subr.mxu0 0.0
    %98 = vmatpush1.msra.mxu0 %v68
    %99 = vmatprep.subr.mxu0 0.0
    %100 = vmatpush1.msra.mxu0 %v69
    %101 = vmatprep.subr.mxu0 0.0
    %102 = vmatpush1.msra.mxu0 %v70
    %103 = vmatprep.subr.mxu0 0.0
    %104 = vmatpush1.msra.mxu0 %v71
    %105 = vmatprep.subr.mxu0 0.0
    %106 = vmatpush1.msra.mxu0 0.0
    %107 = vmatprep.subr.mxu0 0.0
    %108 = vmatpush1.msra.mxu0 0.0
    %109 = vmatprep.subr.mxu0 0.0
    %110 = vmatpush1.msra.mxu0 0.0
    %111 = vmatprep.subr.mxu0 0.0
    %112 = vmatpush1.msra.mxu0 0.0
    %113 = vmatprep.subr.mxu0 0.0
    %114 = vmatpush1.msra.mxu0 0.0
    %115 = vmatprep.subr.mxu0 0.0
    %116 = vmatpush1.msra.mxu0 0.0
    %117 = vmatprep.subr.mxu0 0.0
    %118 = vmatpush1.msra.mxu0 0.0
    %119 = vmatprep.subr.mxu0 0.0
    %120 = vmatpush1.msra.mxu0 0.0
    %121 = vmatprep.subr.mxu0 0.0
    %122 = vmatpush1.msra.mxu0 0.0
    %123 = vmatprep.subr.mxu0 0.0
    %124 = vmatpush1.msra.mxu0 0.0
    %125 = vmatprep.subr.mxu0 0.0
    %126 = vmatpush1.msra.mxu0 0.0
    %127 = vmatprep.subr.mxu0 0.0
    %128 = vmatpush1.msra.mxu0 0.0
    %129 = vmatprep.subr.mxu0 0.0
    %130 = vmatpush1.msra.mxu0 0.0
    %131 = vmatprep.subr.mxu0 0.0
    %132 = vmatpush1.msra.mxu0 0.0
    %133 = vmatprep.subr.mxu0 0.0
    %134 = vmatpush1.msra.mxu0 0.0
    %135 = vmatprep.subr.mxu0 0.0
    %136 = vmatpush1.msra.mxu0 0.0
    %137 = vmatprep.mubr.f32.mxu0 0.0
    %138 = vmatmul.mubr.f32.gmra.mrb[0].mxu0 %v54
    %v139 = vpop.f32.mrb[0].mxu0
    %v140 = vadd.f32 %v72, %v139
    %v141 = vpop.f32.mrb[0].mxu0
    %142 = vmatprep.mubr.f32.mxu0 0.0
    %143 = vmatmul.mubr.f32.gmra.mrb[0].mxu0 %v55
    %v144 = vpop.f32.mrb[0].mxu0
    %v145 = vadd.f32 %v72, %v144
    %v146 = vpop.f32.mrb[0].mxu0
    %147 = vdwg.mxu0
    %v148 = vld [vmem:[%s4] sm:$0x1]
    %v149 = vld [vmem:[%s4 + $0x1] sm:$0x1]
    %vm150 = vcmask 261120
    %v151 = vsel %vm150, %v140, 0.0
    %152 = vadd.xlane.f32.xlu0 %v151
    %v153 = vpop.xlane.xlu0 %152
    %v154 = vsel %vm150, %v145, 0.0
    %155 = vadd.xlane.f32.xlu0 %v154
    %v156 = vpop.xlane.xlu0 %155
    %v157 = vrcp.pop 32.0
    %v158 = vmul.f32 %v153, %v157
    %v159 = vmul.f32 %v156, %v157
    %v160 = vsub.f32 %v140, %v158
    %v161 = vsub.f32 %v145, %v159
    %v162 = vmul.f32 %v160, %v160
    %v163 = vmul.f32 %v161, %v161
    %v164 = vsel %vm150, %v162, 0.0
    %165 = vadd.xlane.f32.xlu0 %v164
    %v166 = vpop.xlane.xlu0 %165
    %v167 = vsel %vm150, %v163, 0.0
    %168 = vadd.xlane.f32.xlu0 %v167
    %v169 = vpop.xlane.xlu0 %168
    %v170 = vmul.f32 %v166, %v157
    %v171 = vmul.f32 %v169, %v157
    %v172 = vadd.f32 %v170, 1e-12
    %v173 = vadd.f32 %v171, 1e-12
    %v174 = vrsqrt.pop %v172
    %v175 = vrsqrt.pop %v173
    %v176 = vmul.f32 %v160, %v174
    %v177 = vmul.f32 %v161, %v175
    %v178 = vlaneseq
    %v179 = vshrl.u32 %v178, 7
    %v180 = vsub.s32 0, %v179
    %v181 = vrot.slane %v148, %v180
    %v182 = vmul.f32 %v176, %v181
    %v183 = vmul.f32 %v177, %v181
    %v184 = vlaneseq
    %v185 = vshrl.u32 %v184, 7
    %v186 = vsub.s32 0, %v185
    %v187 = vrot.slane %v149, %v186
    %v188 = vadd.f32 %v182, %v187
    %v189 = vadd.f32 %v183, %v187
    %v190 = vld [vmem:[%s1] sm:$0x1]
    %v191 = vld [vmem:[%s1 + $0x1] sm:$0x1]
    %v192 = vsub.f32 1.0, %v190
    %v193 = vsub.f32 1.0, %v191
    %v194 = vmul.f32 %v192, -1e+09
    %v195 = vmul.f32 %v193, -1e+09
    %v198 = vlaneseq
    %v199 = vshrl.u32 %v198, 7
    %v200 = vsub.s32 0, %v199
    %v201 = vrot.slane %v194, %v200
    %v202 = vlaneseq
    %v203 = vshrl.u32 %v202, 7
    %v204 = vsub.s32 0, %v203
    %v205 = vrot.slane %v195, %v204
    %v208 = vld [vmem:[%s9] sm:$0xf]
    %v209 = vld [vmem:[%s10] sm:$0xf]
    %v210 = vld [vmem:[%s6] sm:$0xf]
    %v211 = vld [vmem:[%s6 + $0x4] sm:$0xf]
    %v212 = vld [vmem:[%s6 + $0x8] sm:$0xf]
    %v213 = vld [vmem:[%s6 + $0xc] sm:$0xf]
    %v214 = vpack.c.bf16 %v189, %v188
    %v215 = vld [vmem:[%s5] sm:$0xf]
    %v216 = vld [vmem:[%s5 + $0x4] sm:$0xf]
    %v217 = vld [vmem:[%s5 + $0x8] sm:$0xf]
    %v218 = vld [vmem:[%s5 + $0xc] sm:$0xf]
    %v219 = vlaneseq
    %v220 = vshrl.u32 %v219, 7
    %v221 = vsub.s32 0, %v220
    %v222 = vrot.slane %v208, %v221
    %v227 = vunpack.c.l.b16 %v215
    %v228 = vunpack.c.l.b16 %v216
    %v229 = vunpack.c.l.b16 %v217
    %v230 = vunpack.c.l.b16 %v218
    %v231 = vpack.c.b16 %v228, %v227
    %v232 = vpack.c.b16 %v230, %v229
    %v236 = vsel %vm150, %v214, 0
    %238 = vmatprep.subr.bf16.mxu0 0
    %239 = vmatpush1.bf16.msra.mxu0 %v231
    %240 = vmatprep.subr.bf16.mxu0 0
    %241 = vmatpush1.bf16.msra.mxu0 %v232
    %242 = vmatprep.subr.bf16.mxu0 0
    %243 = vmatpush1.bf16.msra.mxu0 0
    %244 = vmatprep.subr.bf16.mxu0 0
    %245 = vmatpush1.bf16.msra.mxu0 0
    %246 = vmatprep.subr.bf16.mxu0 0
    %247 = vmatpush1.bf16.msra.mxu0 0
    %248 = vmatprep.subr.bf16.mxu0 0
    %249 = vmatpush1.bf16.msra.mxu0 0
    %250 = vmatprep.subr.bf16.mxu0 0
    %251 = vmatpush1.bf16.msra.mxu0 0
    %252 = vmatprep.subr.bf16.mxu0 0
    %253 = vmatpush1.bf16.msra.mxu0 0
    %254 = vmatprep.subr.bf16.mxu0 0
    %255 = vmatpush1.bf16.msra.mxu0 0
    %256 = vmatprep.subr.bf16.mxu0 0
    %257 = vmatpush1.bf16.msra.mxu0 0
    %258 = vmatprep.subr.bf16.mxu0 0
    %259 = vmatpush1.bf16.msra.mxu0 0
    %260 = vmatprep.subr.bf16.mxu0 0
    %261 = vmatpush1.bf16.msra.mxu0 0
    %262 = vmatprep.subr.bf16.mxu0 0
    %263 = vmatpush1.bf16.msra.mxu0 0
    %264 = vmatprep.subr.bf16.mxu0 0
    %265 = vmatpush1.bf16.msra.mxu0 0
    %266 = vmatprep.subr.bf16.mxu0 0
    %267 = vmatpush1.bf16.msra.mxu0 0
    %268 = vmatprep.subr.bf16.mxu0 0
    %269 = vmatpush1.bf16.msra.mxu0 0
    %270 = vmatprep.mubr.bf16.mxu0 0
    %271 = vmatmul.mubr.bf16.gmra.mrb[0].mxu0 %v236
    %v272 = vpop.f32.mrb[0].mxu0
    %v273 = vadd.f32 %v222, %v272
    %v274 = vpop.f32.mrb[0].mxu0
    %v275 = vpop.f32.mrb[0].mxu0
    %v276 = vadd.f32 %v222, %v275
    %v277 = vpop.f32.mrb[0].mxu0
    %278 = vdwg.mxu0
    %v279 = vpack.c.bf16 %v273, %v273
    %v280 = vpack.c.bf16 %v276, %v276
    %282 = vrot.lane.b32.xlu0 %v279, 112
    %v283 = vpop.permute.xlu0 %282
    %vm284 = vcmask 130048
    %v286 = vsel %vm284, %v279, 0
    %v289 = vsel %vm284, %v283, 0
    %291 = vmatprep.subr.bf16.mxu0 0
    %292 = vmatpush1.bf16.xpose.msra.mxu0 %v289
    %293 = vmatprep.subr.bf16.mxu0 0
    %294 = vmatpush1.bf16.xpose.msra.mxu0 0
    %295 = vmatprep.subr.bf16.mxu0 0
    %296 = vmatpush1.bf16.xpose.msra.mxu0 0
    %297 = vmatprep.subr.bf16.mxu0 0
    %298 = vmatpush1.bf16.xpose.msra.mxu0 0
    %299 = vmatprep.subr.bf16.mxu0 0
    %300 = vmatpush1.bf16.xpose.msra.mxu0 0
    %301 = vmatprep.subr.bf16.mxu0 0
    %302 = vmatpush1.bf16.xpose.msra.mxu0 0
    %303 = vmatprep.subr.bf16.mxu0 0
    %304 = vmatpush1.bf16.xpose.msra.mxu0 0
    %305 = vmatprep.subr.bf16.mxu0 0
    %306 = vmatpush1.bf16.xpose.msra.mxu0 0
    %307 = vmatprep.subr.bf16.mxu0 0
    %308 = vmatpush1.bf16.xpose.msra.mxu0 0
    %309 = vmatprep.subr.bf16.mxu0 0
    %310 = vmatpush1.bf16.xpose.msra.mxu0 0
    %311 = vmatprep.subr.bf16.mxu0 0
    %312 = vmatpush1.bf16.xpose.msra.mxu0 0
    %313 = vmatprep.subr.bf16.mxu0 0
    %314 = vmatpush1.bf16.xpose.msra.mxu0 0
    %315 = vmatprep.subr.bf16.mxu0 0
    %316 = vmatpush1.bf16.xpose.msra.mxu0 0
    %317 = vmatprep.subr.bf16.mxu0 0
    %318 = vmatpush1.bf16.xpose.msra.mxu0 0
    %319 = vmatprep.subr.bf16.mxu0 0
    %320 = vmatpush1.bf16.xpose.msra.mxu0 0
    %321 = vmatprep.subr.bf16.mxu0 0
    %322 = vmatpush1.bf16.xpose.msra.mxu0 0
    %323 = vmatprep.mubr.bf16.mxu0 0
    %324 = vmatmul.mubr.bf16.gmra.mrb[0].mxu0 %v286
    %v325 = vpop.f32.mrb[0].mxu0
    %v326 = vadd.f32 %v201, %v325
    %v327 = vpop.f32.mrb[0].mxu0
    %v328 = vpop.f32.mrb[0].mxu0
    %v329 = vpop.f32.mrb[0].mxu0
    %330 = vdwg.mxu0
    %332 = vrot.lane.b32.xlu0 %v280, 112
    %v333 = vpop.permute.xlu0 %332
    %v335 = vsel %vm284, %v280, 0
    %v338 = vsel %vm284, %v333, 0
    %340 = vmatprep.subr.bf16.mxu0 0
    %341 = vmatpush1.bf16.xpose.msra.mxu0 %v338
    %342 = vmatprep.subr.bf16.mxu0 0
    %343 = vmatpush1.bf16.xpose.msra.mxu0 0
    %344 = vmatprep.subr.bf16.mxu0 0
    %345 = vmatpush1.bf16.xpose.msra.mxu0 0
    %346 = vmatprep.subr.bf16.mxu0 0
    %347 = vmatpush1.bf16.xpose.msra.mxu0 0
    %348 = vmatprep.subr.bf16.mxu0 0
    %349 = vmatpush1.bf16.xpose.msra.mxu0 0
    %350 = vmatprep.subr.bf16.mxu0 0
    %351 = vmatpush1.bf16.xpose.msra.mxu0 0
    %352 = vmatprep.subr.bf16.mxu0 0
    %353 = vmatpush1.bf16.xpose.msra.mxu0 0
    %354 = vmatprep.subr.bf16.mxu0 0
    %355 = vmatpush1.bf16.xpose.msra.mxu0 0
    %356 = vmatprep.subr.bf16.mxu0 0
    %357 = vmatpush1.bf16.xpose.msra.mxu0 0
    %358 = vmatprep.subr.bf16.mxu0 0
    %359 = vmatpush1.bf16.xpose.msra.mxu0 0
    %360 = vmatprep.subr.bf16.mxu0 0
    %361 = vmatpush1.bf16.xpose.msra.mxu0 0
    %362 = vmatprep.subr.bf16.mxu0 0
    %363 = vmatpush1.bf16.xpose.msra.mxu0 0
    %364 = vmatprep.subr.bf16.mxu0 0
    %365 = vmatpush1.bf16.xpose.msra.mxu0 0
    %366 = vmatprep.subr.bf16.mxu0 0
    %367 = vmatpush1.bf16.xpose.msra.mxu0 0
    %368 = vmatprep.subr.bf16.mxu0 0
    %369 = vmatpush1.bf16.xpose.msra.mxu0 0
    %370 = vmatprep.subr.bf16.mxu0 0
    %371 = vmatpush1.bf16.xpose.msra.mxu0 0
    %372 = vmatprep.mubr.bf16.mxu0 0
    %373 = vmatmul.mubr.bf16.gmra.mrb[0].mxu0 %v335
    %v374 = vpop.f32.mrb[0].mxu0
    %v375 = vadd.f32 %v205, %v374
    %v376 = vpop.f32.mrb[0].mxu0
    %v377 = vpop.f32.mrb[0].mxu0
    %v378 = vpop.f32.mrb[0].mxu0
    %379 = vdwg.mxu0
    %vm380 = vcmask 64512
    %v381 = vsel %vm380, %v326, -inf
    %382 = vmax.xlane.f32.xlu0 %v381
    %v383 = vpop.xlane.xlu0 %382
    %v384 = vsel %vm380, %v375, -inf
    %385 = vmax.xlane.f32.xlu0 %v384
    %v386 = vpop.xlane.xlu0 %385
    %v387 = vsub.f32 %v326, %v383
    %v388 = vsub.f32 %v375, %v386
    %v389 = vmul.f32 %v387, 1.442695
    %v390 = vpow.pop %v389
    %v391 = vmul.f32 %v388, 1.442695
    %v392 = vpow.pop %v391
    %v393 = vsel %vm380, %v390, 0.0
    %394 = vadd.xlane.f32.xlu0 %v393
    %v395 = vpop.xlane.xlu0 %394
    %v396 = vsel %vm380, %v392, 0.0
    %397 = vadd.xlane.f32.xlu0 %v396
    %v398 = vpop.xlane.xlu0 %397
    %v399 = vrcp.pop %v395
    %v400 = vrcp.pop %v398
    %v401 = vmul.f32 %v390, %v399
    %v402 = vmul.f32 %v392, %v400
    %v403 = vpack.c.bf16 %v401, %v401
    %v404 = vpack.c.bf16 %v402, %v402
    %405 = vrot.lane.b32.xlu0 %v279, 96
    %v406 = vpop.permute.xlu0 %405
    %v408 = vsel %vm380, %v403, 0
    %vm410 = vcmask 1043456
    %v412 = vsel %vm410, %v406, 0
    %414 = vmatprep.subr.bf16.mxu0 0
    %415 = vmatpush1.bf16.msra.mxu0 %v412
    %416 = vmatprep.subr.bf16.mxu0 0
    %417 = vmatpush1.bf16.msra.mxu0 0
    %418 = vmatprep.subr.bf16.mxu0 0
    %419 = vmatpush1.bf16.msra.mxu0 0
    %420 = vmatprep.subr.bf16.mxu0 0
    %421 = vmatpush1.bf16.msra.mxu0 0
    %422 = vmatprep.subr.bf16.mxu0 0
    %423 = vmatpush1.bf16.msra.mxu0 0
    %424 = vmatprep.subr.bf16.mxu0 0
    %425 = vmatpush1.bf16.msra.mxu0 0
    %426 = vmatprep.subr.bf16.mxu0 0
    %427 = vmatpush1.bf16.msra.mxu0 0
    %428 = vmatprep.subr.bf16.mxu0 0
    %429 = vmatpush1.bf16.msra.mxu0 0
    %430 = vmatprep.subr.bf16.mxu0 0
    %431 = vmatpush1.bf16.msra.mxu0 0
    %432 = vmatprep.subr.bf16.mxu0 0
    %433 = vmatpush1.bf16.msra.mxu0 0
    %434 = vmatprep.subr.bf16.mxu0 0
    %435 = vmatpush1.bf16.msra.mxu0 0
    %436 = vmatprep.subr.bf16.mxu0 0
    %437 = vmatpush1.bf16.msra.mxu0 0
    %438 = vmatprep.subr.bf16.mxu0 0
    %439 = vmatpush1.bf16.msra.mxu0 0
    %440 = vmatprep.subr.bf16.mxu0 0
    %441 = vmatpush1.bf16.msra.mxu0 0
    %442 = vmatprep.subr.bf16.mxu0 0
    %443 = vmatpush1.bf16.msra.mxu0 0
    %444 = vmatprep.subr.bf16.mxu0 0
    %445 = vmatpush1.bf16.msra.mxu0 0
    %446 = vmatprep.mubr.bf16.mxu0 0
    %447 = vmatmul.mubr.bf16.gmra.mrb[0].mxu0 %v408
    %v448 = vpop.f32.mrb[0].mxu0
    %v449 = vadd.f32 0.0, %v448
    %v450 = vpop.f32.mrb[0].mxu0
    %v451 = vpop.f32.mrb[0].mxu0
    %v452 = vpop.f32.mrb[0].mxu0
    %453 = vdwg.mxu0
    %454 = vrot.lane.b32.xlu0 %v280, 96
    %v455 = vpop.permute.xlu0 %454
    %v457 = vsel %vm380, %v404, 0
    %v460 = vsel %vm410, %v455, 0
    %462 = vmatprep.subr.bf16.mxu0 0
    %463 = vmatpush1.bf16.msra.mxu0 %v460
    %464 = vmatprep.subr.bf16.mxu0 0
    %465 = vmatpush1.bf16.msra.mxu0 0
    %466 = vmatprep.subr.bf16.mxu0 0
    %467 = vmatpush1.bf16.msra.mxu0 0
    %468 = vmatprep.subr.bf16.mxu0 0
    %469 = vmatpush1.bf16.msra.mxu0 0
    %470 = vmatprep.subr.bf16.mxu0 0
    %471 = vmatpush1.bf16.msra.mxu0 0
    %472 = vmatprep.subr.bf16.mxu0 0
    %473 = vmatpush1.bf16.msra.mxu0 0
    %474 = vmatprep.subr.bf16.mxu0 0
    %475 = vmatpush1.bf16.msra.mxu0 0
    %476 = vmatprep.subr.bf16.mxu0 0
    %477 = vmatpush1.bf16.msra.mxu0 0
    %478 = vmatprep.subr.bf16.mxu0 0
    %479 = vmatpush1.bf16.msra.mxu0 0
    %480 = vmatprep.subr.bf16.mxu0 0
    %481 = vmatpush1.bf16.msra.mxu0 0
    %482 = vmatprep.subr.bf16.mxu0 0
    %483 = vmatpush1.bf16.msra.mxu0 0
    %484 = vmatprep.subr.bf16.mxu0 0
    %485 = vmatpush1.bf16.msra.mxu0 0
    %486 = vmatprep.subr.bf16.mxu0 0
    %487 = vmatpush1.bf16.msra.mxu0 0
    %488 = vmatprep.subr.bf16.mxu0 0
    %489 = vmatpush1.bf16.msra.mxu0 0
    %490 = vmatprep.subr.bf16.mxu0 0
    %491 = vmatpush1.bf16.msra.mxu0 0
    %492 = vmatprep.subr.bf16.mxu0 0
    %493 = vmatpush1.bf16.msra.mxu0 0
    %494 = vmatprep.mubr.bf16.mxu0 0
    %495 = vmatmul.mubr.bf16.gmra.mrb[0].mxu0 %v457
    %v496 = vpop.f32.mrb[0].mxu0
    %v497 = vadd.f32 0.0, %v496
    %v498 = vpop.f32.mrb[0].mxu0
    %v499 = vpop.f32.mrb[0].mxu0
    %v500 = vpop.f32.mrb[0].mxu0
    %501 = vdwg.mxu0
    %v502 = vpack.c.bf16 %v497, %v449
    %503 = vrot.lane.b32.xlu0 %v279, 80
    %v504 = vpop.permute.xlu0 %503
    %505 = vrot.lane.b32.xlu0 %v279, 64
    %v506 = vpop.permute.xlu0 %505
    %v508 = vsel %vm284, %v504, 0
    %v511 = vsel %vm284, %v506, 0
    %513 = vmatprep.subr.bf16.mxu0 0
    %514 = vmatpush1.bf16.xpose.msra.mxu0 %v511
    %515 = vmatprep.subr.bf16.mxu0 0
    %516 = vmatpush1.bf16.xpose.msra.mxu0 0
    %517 = vmatprep.subr.bf16.mxu0 0
    %518 = vmatpush1.bf16.xpose.msra.mxu0 0
    %519 = vmatprep.subr.bf16.mxu0 0
    %520 = vmatpush1.bf16.xpose.msra.mxu0 0
    %521 = vmatprep.subr.bf16.mxu0 0
    %522 = vmatpush1.bf16.xpose.msra.mxu0 0
    %523 = vmatprep.subr.bf16.mxu0 0
    %524 = vmatpush1.bf16.xpose.msra.mxu0 0
    %525 = vmatprep.subr.bf16.mxu0 0
    %526 = vmatpush1.bf16.xpose.msra.mxu0 0
    %527 = vmatprep.subr.bf16.mxu0 0
    %528 = vmatpush1.bf16.xpose.msra.mxu0 0
    %529 = vmatprep.subr.bf16.mxu0 0
    %530 = vmatpush1.bf16.xpose.msra.mxu0 0
    %531 = vmatprep.subr.bf16.mxu0 0
    %532 = vmatpush1.bf16.xpose.msra.mxu0 0
    %533 = vmatprep.subr.bf16.mxu0 0
    %534 = vmatpush1.bf16.xpose.msra.mxu0 0
    %535 = vmatprep.subr.bf16.mxu0 0
    %536 = vmatpush1.bf16.xpose.msra.mxu0 0
    %537 = vmatprep.subr.bf16.mxu0 0
    %538 = vmatpush1.bf16.xpose.msra.mxu0 0
    %539 = vmatprep.subr.bf16.mxu0 0
    %540 = vmatpush1.bf16.xpose.msra.mxu0 0
    %541 = vmatprep.subr.bf16.mxu0 0
    %542 = vmatpush1.bf16.xpose.msra.mxu0 0
    %543 = vmatprep.subr.bf16.mxu0 0
    %544 = vmatpush1.bf16.xpose.msra.mxu0 0
    %545 = vmatprep.mubr.bf16.mxu0 0
    %546 = vmatmul.mubr.bf16.gmra.mrb[0].mxu0 %v508
    %v547 = vpop.f32.mrb[0].mxu0
    %v548 = vadd.f32 %v201, %v547
    %v549 = vpop.f32.mrb[0].mxu0
    %v550 = vpop.f32.mrb[0].mxu0
    %v551 = vpop.f32.mrb[0].mxu0
    %552 = vdwg.mxu0
    %553 = vrot.lane.b32.xlu0 %v280, 80
    %v554 = vpop.permute.xlu0 %553
    %555 = vrot.lane.b32.xlu0 %v280, 64
    %v556 = vpop.permute.xlu0 %555
    %v558 = vsel %vm284, %v554, 0
    %v561 = vsel %vm284, %v556, 0
    %563 = vmatprep.subr.bf16.mxu0 0
    %564 = vmatpush1.bf16.xpose.msra.mxu0 %v561
    %565 = vmatprep.subr.bf16.mxu0 0
    %566 = vmatpush1.bf16.xpose.msra.mxu0 0
    %567 = vmatprep.subr.bf16.mxu0 0
    %568 = vmatpush1.bf16.xpose.msra.mxu0 0
    %569 = vmatprep.subr.bf16.mxu0 0
    %570 = vmatpush1.bf16.xpose.msra.mxu0 0
    %571 = vmatprep.subr.bf16.mxu0 0
    %572 = vmatpush1.bf16.xpose.msra.mxu0 0
    %573 = vmatprep.subr.bf16.mxu0 0
    %574 = vmatpush1.bf16.xpose.msra.mxu0 0
    %575 = vmatprep.subr.bf16.mxu0 0
    %576 = vmatpush1.bf16.xpose.msra.mxu0 0
    %577 = vmatprep.subr.bf16.mxu0 0
    %578 = vmatpush1.bf16.xpose.msra.mxu0 0
    %579 = vmatprep.subr.bf16.mxu0 0
    %580 = vmatpush1.bf16.xpose.msra.mxu0 0
    %581 = vmatprep.subr.bf16.mxu0 0
    %582 = vmatpush1.bf16.xpose.msra.mxu0 0
    %583 = vmatprep.subr.bf16.mxu0 0
    %584 = vmatpush1.bf16.xpose.msra.mxu0 0
    %585 = vmatprep.subr.bf16.mxu0 0
    %586 = vmatpush1.bf16.xpose.msra.mxu0 0
    %587 = vmatprep.subr.bf16.mxu0 0
    %588 = vmatpush1.bf16.xpose.msra.mxu0 0
    %589 = vmatprep.subr.bf16.mxu0 0
    %590 = vmatpush1.bf16.xpose.msra.mxu0 0
    %591 = vmatprep.subr.bf16.mxu0 0
    %592 = vmatpush1.bf16.xpose.msra.mxu0 0
    %593 = vmatprep.subr.bf16.mxu0 0
    %594 = vmatpush1.bf16.xpose.msra.mxu0 0
    %595 = vmatprep.mubr.bf16.mxu0 0
    %596 = vmatmul.mubr.bf16.gmra.mrb[0].mxu0 %v558
    %v597 = vpop.f32.mrb[0].mxu0
    %v598 = vadd.f32 %v205, %v597
    %v599 = vpop.f32.mrb[0].mxu0
    %v600 = vpop.f32.mrb[0].mxu0
    %v601 = vpop.f32.mrb[0].mxu0
    %602 = vdwg.mxu0
    %v603 = vsel %vm380, %v548, -inf
    %604 = vmax.xlane.f32.xlu0 %v603
    %v605 = vpop.xlane.xlu0 %604
    %v606 = vsel %vm380, %v598, -inf
    %607 = vmax.xlane.f32.xlu0 %v606
    %v608 = vpop.xlane.xlu0 %607
    %v609 = vsub.f32 %v548, %v605
    %v610 = vsub.f32 %v598, %v608
    %v611 = vmul.f32 %v609, 1.442695
    %v612 = vpow.pop %v611
    %v613 = vmul.f32 %v610, 1.442695
    %v614 = vpow.pop %v613
    %v615 = vsel %vm380, %v612, 0.0
    %616 = vadd.xlane.f32.xlu0 %v615
    %v617 = vpop.xlane.xlu0 %616
    %v618 = vsel %vm380, %v614, 0.0
    %619 = vadd.xlane.f32.xlu0 %v618
    %v620 = vpop.xlane.xlu0 %619
    %v621 = vrcp.pop %v617
    %v622 = vrcp.pop %v620
    %v623 = vmul.f32 %v612, %v621
    %v624 = vmul.f32 %v614, %v622
    %v625 = vpack.c.bf16 %v623, %v623
    %v626 = vpack.c.bf16 %v624, %v624
    %627 = vrot.lane.b32.xlu0 %v279, 48
    %v628 = vpop.permute.xlu0 %627
    %v630 = vsel %vm380, %v625, 0
    %v633 = vsel %vm410, %v628, 0
    %635 = vmatprep.subr.bf16.mxu0 0
    %636 = vmatpush1.bf16.msra.mxu0 %v633
    %637 = vmatprep.subr.bf16.mxu0 0
    %638 = vmatpush1.bf16.msra.mxu0 0
    %639 = vmatprep.subr.bf16.mxu0 0
    %640 = vmatpush1.bf16.msra.mxu0 0
    %641 = vmatprep.subr.bf16.mxu0 0
    %642 = vmatpush1.bf16.msra.mxu0 0
    %643 = vmatprep.subr.bf16.mxu0 0
    %644 = vmatpush1.bf16.msra.mxu0 0
    %645 = vmatprep.subr.bf16.mxu0 0
    %646 = vmatpush1.bf16.msra.mxu0 0
    %647 = vmatprep.subr.bf16.mxu0 0
    %648 = vmatpush1.bf16.msra.mxu0 0
    %649 = vmatprep.subr.bf16.mxu0 0
    %650 = vmatpush1.bf16.msra.mxu0 0
    %651 = vmatprep.subr.bf16.mxu0 0
    %652 = vmatpush1.bf16.msra.mxu0 0
    %653 = vmatprep.subr.bf16.mxu0 0
    %654 = vmatpush1.bf16.msra.mxu0 0
    %655 = vmatprep.subr.bf16.mxu0 0
    %656 = vmatpush1.bf16.msra.mxu0 0
    %657 = vmatprep.subr.bf16.mxu0 0
    %658 = vmatpush1.bf16.msra.mxu0 0
    %659 = vmatprep.subr.bf16.mxu0 0
    %660 = vmatpush1.bf16.msra.mxu0 0
    %661 = vmatprep.subr.bf16.mxu0 0
    %662 = vmatpush1.bf16.msra.mxu0 0
    %663 = vmatprep.subr.bf16.mxu0 0
    %664 = vmatpush1.bf16.msra.mxu0 0
    %665 = vmatprep.subr.bf16.mxu0 0
    %666 = vmatpush1.bf16.msra.mxu0 0
    %667 = vmatprep.mubr.bf16.mxu0 0
    %668 = vmatmul.mubr.bf16.gmra.mrb[0].mxu0 %v630
    %v669 = vpop.f32.mrb[0].mxu0
    %v670 = vadd.f32 0.0, %v669
    %v671 = vpop.f32.mrb[0].mxu0
    %v672 = vpop.f32.mrb[0].mxu0
    %v673 = vpop.f32.mrb[0].mxu0
    %674 = vdwg.mxu0
    %675 = vrot.lane.b32.xlu0 %v280, 48
    %v676 = vpop.permute.xlu0 %675
    %v678 = vsel %vm380, %v626, 0
    %v681 = vsel %vm410, %v676, 0
    %683 = vmatprep.subr.bf16.mxu0 0
    %684 = vmatpush1.bf16.msra.mxu0 %v681
    %685 = vmatprep.subr.bf16.mxu0 0
    %686 = vmatpush1.bf16.msra.mxu0 0
    %687 = vmatprep.subr.bf16.mxu0 0
    %688 = vmatpush1.bf16.msra.mxu0 0
    %689 = vmatprep.subr.bf16.mxu0 0
    %690 = vmatpush1.bf16.msra.mxu0 0
    %691 = vmatprep.subr.bf16.mxu0 0
    %692 = vmatpush1.bf16.msra.mxu0 0
    %693 = vmatprep.subr.bf16.mxu0 0
    %694 = vmatpush1.bf16.msra.mxu0 0
    %695 = vmatprep.subr.bf16.mxu0 0
    %696 = vmatpush1.bf16.msra.mxu0 0
    %697 = vmatprep.subr.bf16.mxu0 0
    %698 = vmatpush1.bf16.msra.mxu0 0
    %699 = vmatprep.subr.bf16.mxu0 0
    %700 = vmatpush1.bf16.msra.mxu0 0
    %701 = vmatprep.subr.bf16.mxu0 0
    %702 = vmatpush1.bf16.msra.mxu0 0
    %703 = vmatprep.subr.bf16.mxu0 0
    %704 = vmatpush1.bf16.msra.mxu0 0
    %705 = vmatprep.subr.bf16.mxu0 0
    %706 = vmatpush1.bf16.msra.mxu0 0
    %707 = vmatprep.subr.bf16.mxu0 0
    %708 = vmatpush1.bf16.msra.mxu0 0
    %709 = vmatprep.subr.bf16.mxu0 0
    %710 = vmatpush1.bf16.msra.mxu0 0
    %711 = vmatprep.subr.bf16.mxu0 0
    %712 = vmatpush1.bf16.msra.mxu0 0
    %713 = vmatprep.subr.bf16.mxu0 0
    %714 = vmatpush1.bf16.msra.mxu0 0
    %715 = vmatprep.mubr.bf16.mxu0 0
    %716 = vmatmul.mubr.bf16.gmra.mrb[0].mxu0 %v678
    %v717 = vpop.f32.mrb[0].mxu0
    %v718 = vadd.f32 0.0, %v717
    %v719 = vpop.f32.mrb[0].mxu0
    %v720 = vpop.f32.mrb[0].mxu0
    %v721 = vpop.f32.mrb[0].mxu0
    %722 = vdwg.mxu0
    %v723 = vpack.c.bf16 %v718, %v670
    %v726 = vunpack.c.l.b16 %v212
    %v727 = vunpack.c.l.b16 %v213
    %v728 = vpack.c.b16 %v727, %v726
    %v731 = vsel %vm284, %v723, 0
    %733 = vmatprep.subr.bf16.mxu0 0
    %734 = vmatpush1.bf16.msra.mxu0 %v728
    %735 = vmatprep.subr.bf16.mxu0 0
    %736 = vmatpush1.bf16.msra.mxu0 0
    %737 = vmatprep.subr.bf16.mxu0 0
    %738 = vmatpush1.bf16.msra.mxu0 0
    %739 = vmatprep.subr.bf16.mxu0 0
    %740 = vmatpush1.bf16.msra.mxu0 0
    %741 = vmatprep.subr.bf16.mxu0 0
    %742 = vmatpush1.bf16.msra.mxu0 0
    %743 = vmatprep.subr.bf16.mxu0 0
    %744 = vmatpush1.bf16.msra.mxu0 0
    %745 = vmatprep.subr.bf16.mxu0 0
    %746 = vmatpush1.bf16.msra.mxu0 0
    %747 = vmatprep.subr.bf16.mxu0 0
    %748 = vmatpush1.bf16.msra.mxu0 0
    %749 = vmatprep.subr.bf16.mxu0 0
    %750 = vmatpush1.bf16.msra.mxu0 0
    %751 = vmatprep.subr.bf16.mxu0 0
    %752 = vmatpush1.bf16.msra.mxu0 0
    %753 = vmatprep.subr.bf16.mxu0 0
    %754 = vmatpush1.bf16.msra.mxu0 0
    %755 = vmatprep.subr.bf16.mxu0 0
    %756 = vmatpush1.bf16.msra.mxu0 0
    %757 = vmatprep.subr.bf16.mxu0 0
    %758 = vmatpush1.bf16.msra.mxu0 0
    %759 = vmatprep.subr.bf16.mxu0 0
    %760 = vmatpush1.bf16.msra.mxu0 0
    %761 = vmatprep.subr.bf16.mxu0 0
    %762 = vmatpush1.bf16.msra.mxu0 0
    %763 = vmatprep.subr.bf16.mxu0 0
    %764 = vmatpush1.bf16.msra.mxu0 0
    %765 = vmatprep.mubr.bf16.mxu0 0
    %766 = vmatmul.mubr.bf16.gmra.mrb[0].mxu0 %v731
    %v767 = vpop.f32.mrb[0].mxu0
    %v768 = vadd.f32 0.0, %v767
    %v769 = vpop.f32.mrb[0].mxu0
    %v770 = vpop.f32.mrb[0].mxu0
    %v771 = vadd.f32 0.0, %v770
    %v772 = vpop.f32.mrb[0].mxu0
    %773 = vdwg.mxu0
    %v776 = vunpack.c.l.b16 %v210
    %v777 = vunpack.c.l.b16 %v211
    %v778 = vpack.c.b16 %v777, %v776
    %v781 = vsel %vm284, %v502, 0
    %783 = vmatprep.subr.bf16.mxu0 0
    %784 = vmatpush1.bf16.msra.mxu0 %v778
    %785 = vmatprep.subr.bf16.mxu0 0
    %786 = vmatpush1.bf16.msra.mxu0 0
    %787 = vmatprep.subr.bf16.mxu0 0
    %788 = vmatpush1.bf16.msra.mxu0 0
    %789 = vmatprep.subr.bf16.mxu0 0
    %790 = vmatpush1.bf16.msra.mxu0 0
    %791 = vmatprep.subr.bf16.mxu0 0
    %792 = vmatpush1.bf16.msra.mxu0 0
    %793 = vmatprep.subr.bf16.mxu0 0
    %794 = vmatpush1.bf16.msra.mxu0 0
    %795 = vmatprep.subr.bf16.mxu0 0
    %796 = vmatpush1.bf16.msra.mxu0 0
    %797 = vmatprep.subr.bf16.mxu0 0
    %798 = vmatpush1.bf16.msra.mxu0 0
    %799 = vmatprep.subr.bf16.mxu0 0
    %800 = vmatpush1.bf16.msra.mxu0 0
    %801 = vmatprep.subr.bf16.mxu0 0
    %802 = vmatpush1.bf16.msra.mxu0 0
    %803 = vmatprep.subr.bf16.mxu0 0
    %804 = vmatpush1.bf16.msra.mxu0 0
    %805 = vmatprep.subr.bf16.mxu0 0
    %806 = vmatpush1.bf16.msra.mxu0 0
    %807 = vmatprep.subr.bf16.mxu0 0
    %808 = vmatpush1.bf16.msra.mxu0 0
    %809 = vmatprep.subr.bf16.mxu0 0
    %810 = vmatpush1.bf16.msra.mxu0 0
    %811 = vmatprep.subr.bf16.mxu0 0
    %812 = vmatpush1.bf16.msra.mxu0 0
    %813 = vmatprep.subr.bf16.mxu0 0
    %814 = vmatpush1.bf16.msra.mxu0 0
    %815 = vmatprep.mubr.bf16.mxu0 0
    %816 = vmatmul.mubr.bf16.gmra.mrb[0].mxu0 %v781
    %v817 = vpop.f32.mrb[0].mxu0
    %v818 = vadd.f32 %v768, %v817
    %v819 = vpop.f32.mrb[0].mxu0
    %v820 = vpop.f32.mrb[0].mxu0
    %v821 = vadd.f32 %v771, %v820
    %v822 = vpop.f32.mrb[0].mxu0
    %823 = vdwg.mxu0
    %v824 = vadd.f32 %v188, %v818
    %v825 = vadd.f32 %v189, %v821
    %v826 = vlaneseq
    %v827 = vshrl.u32 %v826, 7
    %v828 = vsub.s32 1, %v827
    %v829 = vrot.slane %v208, %v828
    %v830 = vadd.f32 %v824, %v829
    %v831 = vadd.f32 %v825, %v829
    %v832 = vsel %vm150, %v830, 0.0
    %833 = vadd.xlane.f32.xlu0 %v832
    %v834 = vpop.xlane.xlu0 %833
    %v835 = vsel %vm150, %v831, 0.0
    %836 = vadd.xlane.f32.xlu0 %v835
    %v837 = vpop.xlane.xlu0 %836
    %v838 = vmul.f32 %v834, %v157
    %v839 = vmul.f32 %v837, %v157
    %v840 = vsub.f32 %v830, %v838
    %v841 = vsub.f32 %v831, %v839
    %v842 = vmul.f32 %v840, %v840
    %v843 = vmul.f32 %v841, %v841
    %v844 = vsel %vm150, %v842, 0.0
    %845 = vadd.xlane.f32.xlu0 %v844
    %v846 = vpop.xlane.xlu0 %845
    %v847 = vsel %vm150, %v843, 0.0
    %848 = vadd.xlane.f32.xlu0 %v847
    %v849 = vpop.xlane.xlu0 %848
    %v850 = vmul.f32 %v846, %v157
    %v851 = vmul.f32 %v849, %v157
    %v852 = vadd.f32 %v850, 1e-12
    %v853 = vadd.f32 %v851, 1e-12
    %v854 = vrsqrt.pop %v852
    %v855 = vrsqrt.pop %v853
    %v856 = vmul.f32 %v840, %v854
    %v857 = vmul.f32 %v841, %v855
    %v858 = vlaneseq
    %v859 = vshrl.u32 %v858, 7
    %v860 = vsub.s32 0, %v859
    %v861 = vrot.slane %v209, %v860
    %v862 = vmul.f32 %v856, %v861
    %v863 = vmul.f32 %v857, %v861
    %v864 = vlaneseq
    %v865 = vshrl.u32 %v864, 7
    %v866 = vsub.s32 1, %v865
    %v867 = vrot.slane %v209, %v866
    %v868 = vadd.f32 %v862, %v867
    %v869 = vadd.f32 %v863, %v867
    %v870 = vpack.c.bf16 %v869, %v868
    %v871 = vld [vmem:[%s7] sm:$0xf]
    %v872 = vld [vmem:[%s7 + $0x4] sm:$0xf]
    %v873 = vld [vmem:[%s7 + $0x8] sm:$0xf]
    %v874 = vld [vmem:[%s7 + $0xc] sm:$0xf]
    %v875 = vlaneseq
    %v876 = vshrl.u32 %v875, 7
    %v877 = vsub.s32 2, %v876
    %v878 = vrot.slane %v208, %v877
    %v883 = vunpack.c.l.b16 %v871
    %v884 = vunpack.c.l.b16 %v872
    %v885 = vunpack.c.l.b16 %v873
    %v886 = vunpack.c.l.b16 %v874
    %v887 = vpack.c.b16 %v884, %v883
    %v888 = vpack.c.b16 %v886, %v885
    %v892 = vsel %vm150, %v870, 0
    %894 = vmatprep.subr.bf16.mxu0 0
    %895 = vmatpush1.bf16.msra.mxu0 %v887
    %896 = vmatprep.subr.bf16.mxu0 0
    %897 = vmatpush1.bf16.msra.mxu0 %v888
    %898 = vmatprep.subr.bf16.mxu0 0
    %899 = vmatpush1.bf16.msra.mxu0 0
    %900 = vmatprep.subr.bf16.mxu0 0
    %901 = vmatpush1.bf16.msra.mxu0 0
    %902 = vmatprep.subr.bf16.mxu0 0
    %903 = vmatpush1.bf16.msra.mxu0 0
    %904 = vmatprep.subr.bf16.mxu0 0
    %905 = vmatpush1.bf16.msra.mxu0 0
    %906 = vmatprep.subr.bf16.mxu0 0
    %907 = vmatpush1.bf16.msra.mxu0 0
    %908 = vmatprep.subr.bf16.mxu0 0
    %909 = vmatpush1.bf16.msra.mxu0 0
    %910 = vmatprep.subr.bf16.mxu0 0
    %911 = vmatpush1.bf16.msra.mxu0 0
    %912 = vmatprep.subr.bf16.mxu0 0
    %913 = vmatpush1.bf16.msra.mxu0 0
    %914 = vmatprep.subr.bf16.mxu0 0
    %915 = vmatpush1.bf16.msra.mxu0 0
    %916 = vmatprep.subr.bf16.mxu0 0
    %917 = vmatpush1.bf16.msra.mxu0 0
    %918 = vmatprep.subr.bf16.mxu0 0
    %919 = vmatpush1.bf16.msra.mxu0 0
    %920 = vmatprep.subr.bf16.mxu0 0
    %921 = vmatpush1.bf16.msra.mxu0 0
    %922 = vmatprep.subr.bf16.mxu0 0
    %923 = vmatpush1.bf16.msra.mxu0 0
    %924 = vmatprep.subr.bf16.mxu0 0
    %925 = vmatpush1.bf16.msra.mxu0 0
    %926 = vmatprep.mubr.bf16.mxu0 0
    %927 = vmatmul.mubr.bf16.gmra.mrb[0].mxu0 %v892
    %v928 = vpop.f32.mrb[0].mxu0
    %v929 = vadd.f32 %v878, %v928
    %v930 = vpop.f32.mrb[0].mxu0
    %v931 = vpop.f32.mrb[0].mxu0
    %v932 = vadd.f32 %v878, %v931
    %v933 = vpop.f32.mrb[0].mxu0
    %934 = vdwg.mxu0
    %v935 = vmul.f32 %v929, 0.5
    %v936 = vmul.f32 %v932, 0.5
    %v937 = vmul.f32 %v929, 0.044715
    %v938 = vmul.f32 %v932, 0.044715
    %v939 = vmul.f32 %v937, %v929
    %v940 = vmul.f32 %v938, %v932
    %v941 = vmul.f32 %v939, %v929
    %v942 = vmul.f32 %v940, %v932
    %v943 = vadd.f32 %v929, %v941
    %v944 = vadd.f32 %v932, %v942
    %v945 = vmul.f32 %v943, 0.7978846
    %v946 = vmul.f32 %v944, 0.7978846
    %v947 = vtanh.pop %v945
    %v948 = vtanh.pop %v946
    %v949 = vadd.f32 %v947, 1.0
    %v950 = vadd.f32 %v948, 1.0
    %v951 = vmul.f32 %v935, %v949
    %v952 = vmul.f32 %v936, %v950
    %v953 = vpack.c.bf16 %v952, %v951
    %v954 = vld [vmem:[%s8] sm:$0xf]
    %v955 = vld [vmem:[%s8 + $0x4] sm:$0xf]
    %v956 = vld [vmem:[%s8 + $0x8] sm:$0xf]
    %v957 = vld [vmem:[%s8 + $0xc] sm:$0xf]
    %v958 = vld [vmem:[%s8 + $0x10] sm:$0xf]
    %v959 = vld [vmem:[%s8 + $0x14] sm:$0xf]
    %v960 = vld [vmem:[%s8 + $0x18] sm:$0xf]
    %v961 = vld [vmem:[%s8 + $0x1c] sm:$0xf]
    %v962 = vlaneseq
    %v963 = vshrl.u32 %v962, 7
    %v964 = vsub.s32 3, %v963
    %v965 = vrot.slane %v208, %v964
    %v974 = vunpack.c.l.b16 %v954
    %v975 = vunpack.c.l.b16 %v955
    %v976 = vunpack.c.l.b16 %v956
    %v977 = vunpack.c.l.b16 %v957
    %v978 = vunpack.c.l.b16 %v958
    %v979 = vunpack.c.l.b16 %v959
    %v980 = vunpack.c.l.b16 %v960
    %v981 = vunpack.c.l.b16 %v961
    %v982 = vpack.c.b16 %v975, %v974
    %v983 = vpack.c.b16 %v977, %v976
    %v984 = vpack.c.b16 %v979, %v978
    %v985 = vpack.c.b16 %v981, %v980
    %vm990 = vcmask 523264
    %v992 = vsel %vm990, %v953, 0
    %994 = vmatprep.subr.bf16.mxu0 0
    %995 = vmatpush1.bf16.msra.mxu0 %v982
    %996 = vmatprep.subr.bf16.mxu0 0
    %997 = vmatpush1.bf16.msra.mxu0 %v983
    %998 = vmatprep.subr.bf16.mxu0 0
    %999 = vmatpush1.bf16.msra.mxu0 %v984
    %1000 = vmatprep.subr.bf16.mxu0 0
    %1001 = vmatpush1.bf16.msra.mxu0 %v985
    %1002 = vmatprep.subr.bf16.mxu0 0
    %1003 = vmatpush1.bf16.msra.mxu0 0
    %1004 = vmatprep.subr.bf16.mxu0 0
    %1005 = vmatpush1.bf16.msra.mxu0 0
    %1006 = vmatprep.subr.bf16.mxu0 0
    %1007 = vmatpush1.bf16.msra.mxu0 0
    %1008 = vmatprep.subr.bf16.mxu0 0
    %1009 = vmatpush1.bf16.msra.mxu0 0
    %1010 = vmatprep.subr.bf16.mxu0 0
    %1011 = vmatpush1.bf16.msra.mxu0 0
    %1012 = vmatprep.subr.bf16.mxu0 0
    %1013 = vmatpush1.bf16.msra.mxu0 0
    %1014 = vmatprep.subr.bf16.mxu0 0
    %1015 = vmatpush1.bf16.msra.mxu0 0
    %1016 = vmatprep.subr.bf16.mxu0 0
    %1017 = vmatpush1.bf16.msra.mxu0 0
    %1018 = vmatprep.subr.bf16.mxu0 0
    %1019 = vmatpush1.bf16.msra.mxu0 0
    %1020 = vmatprep.subr.bf16.mxu0 0
    %1021 = vmatpush1.bf16.msra.mxu0 0
    %1022 = vmatprep.subr.bf16.mxu0 0
    %1023 = vmatpush1.bf16.msra.mxu0 0
    %1024 = vmatprep.subr.bf16.mxu0 0
    %1025 = vmatpush1.bf16.msra.mxu0 0
    %1026 = vmatprep.mubr.bf16.mxu0 0
    %1027 = vmatmul.mubr.bf16.gmra.mrb[0].mxu0 %v992
    %v1028 = vpop.f32.mrb[0].mxu0
    %v1029 = vadd.f32 %v965, %v1028
    %v1030 = vpop.f32.mrb[0].mxu0
    %v1031 = vpop.f32.mrb[0].mxu0
    %v1032 = vadd.f32 %v965, %v1031
    %v1033 = vpop.f32.mrb[0].mxu0
    %1034 = vdwg.mxu0
    %v1035 = vadd.f32 %v868, %v1029
    %v1036 = vadd.f32 %v869, %v1032
    %v1037 = vsel %vm150, %v1035, 0.0
    %1038 = vadd.xlane.f32.xlu0 %v1037
    %v1039 = vpop.xlane.xlu0 %1038
    %v1040 = vsel %vm150, %v1036, 0.0
    %1041 = vadd.xlane.f32.xlu0 %v1040
    %v1042 = vpop.xlane.xlu0 %1041
    %v1043 = vmul.f32 %v1039, %v157
    %v1044 = vmul.f32 %v1042, %v157
    %v1045 = vsub.f32 %v1035, %v1043
    %v1046 = vsub.f32 %v1036, %v1044
    %v1047 = vmul.f32 %v1045, %v1045
    %v1048 = vmul.f32 %v1046, %v1046
    %v1049 = vsel %vm150, %v1047, 0.0
    %1050 = vadd.xlane.f32.xlu0 %v1049
    %v1051 = vpop.xlane.xlu0 %1050
    %v1052 = vsel %vm150, %v1048, 0.0
    %1053 = vadd.xlane.f32.xlu0 %v1052
    %v1054 = vpop.xlane.xlu0 %1053
    %v1055 = vmul.f32 %v1051, %v157
    %v1056 = vmul.f32 %v1054, %v157
    %v1057 = vadd.f32 %v1055, 1e-12
    %v1058 = vadd.f32 %v1056, 1e-12
    %v1059 = vrsqrt.pop %v1057
    %v1060 = vrsqrt.pop %v1058
    %v1061 = vmul.f32 %v1045, %v1059
    %v1062 = vmul.f32 %v1046, %v1060
    %v1063 = vlaneseq
    %v1064 = vshrl.u32 %v1063, 7
    %v1065 = vsub.s32 2, %v1064
    %v1066 = vrot.slane %v209, %v1065
    %v1067 = vmul.f32 %v1061, %v1066
    %v1068 = vmul.f32 %v1062, %v1066
    %v1069 = vlaneseq
    %v1070 = vshrl.u32 %v1069, 7
    %v1071 = vsub.s32 3, %v1070
    %v1072 = vrot.slane %v209, %v1071
    %v1073 = vadd.f32 %v1067, %v1072
    %v1074 = vadd.f32 %v1068, %v1072
    %s1075 = scalar_lea.vmem %s9, 4
    %v1076 = vld [vmem:[%s1075] sm:$0xf]
    %s1077 = scalar_lea.vmem %s10, 4
    %v1078 = vld [vmem:[%s1077] sm:$0xf]
    %s1079 = scalar_lea.vmem %s6, 16
    %v1080 = vld [vmem:[%s1079] sm:$0xf]
    %v1081 = vld [vmem:[%s1079 + $0x4] sm:$0xf]
    %v1082 = vld [vmem:[%s1079 + $0x8] sm:$0xf]
    %v1083 = vld [vmem:[%s1079 + $0xc] sm:$0xf]
    %v1084 = vpack.c.bf16 %v1074, %v1073
    %s1085 = scalar_lea.vmem %s5, 16
    %v1086 = vld [vmem:[%s1085] sm:$0xf]
    %v1087 = vld [vmem:[%s1085 + $0x4] sm:$0xf]
    %v1088 = vld [vmem:[%s1085 + $0x8] sm:$0xf]
    %v1089 = vld [vmem:[%s1085 + $0xc] sm:$0xf]
    %v1090 = vlaneseq
    %v1091 = vshrl.u32 %v1090, 7
    %v1092 = vsub.s32 0, %v1091
    %v1093 = vrot.slane %v1076, %v1092
    %v1098 = vunpack.c.l.b16 %v1086
    %v1099 = vunpack.c.l.b16 %v1087
    %v1100 = vunpack.c.l.b16 %v1088
    %v1101 = vunpack.c.l.b16 %v1089
    %v1102 = vpack.c.b16 %v1099, %v1098
    %v1103 = vpack.c.b16 %v1101, %v1100
    %v1107 = vsel %vm150, %v1084, 0
    %1109 = vmatprep.subr.bf16.mxu0 0
    %1110 = vmatpush1.bf16.msra.mxu0 %v1102
    %1111 = vmatprep.subr.bf16.mxu0 0
    %1112 = vmatpush1.bf16.msra.mxu0 %v1103
    %1113 = vmatprep.subr.bf16.mxu0 0
    %1114 = vmatpush1.bf16.msra.mxu0 0
    %1115 = vmatprep.subr.bf16.mxu0 0
    %1116 = vmatpush1.bf16.msra.mxu0 0
    %1117 = vmatprep.subr.bf16.mxu0 0
    %1118 = vmatpush1.bf16.msra.mxu0 0
    %1119 = vmatprep.subr.bf16.mxu0 0
    %1120 = vmatpush1.bf16.msra.mxu0 0
    %1121 = vmatprep.subr.bf16.mxu0 0
    %1122 = vmatpush1.bf16.msra.mxu0 0
    %1123 = vmatprep.subr.bf16.mxu0 0
    %1124 = vmatpush1.bf16.msra.mxu0 0
    %1125 = vmatprep.subr.bf16.mxu0 0
    %1126 = vmatpush1.bf16.msra.mxu0 0
    %1127 = vmatprep.subr.bf16.mxu0 0
    %1128 = vmatpush1.bf16.msra.mxu0 0
    %1129 = vmatprep.subr.bf16.mxu0 0
    %1130 = vmatpush1.bf16.msra.mxu0 0
    %1131 = vmatprep.subr.bf16.mxu0 0
    %1132 = vmatpush1.bf16.msra.mxu0 0
    %1133 = vmatprep.subr.bf16.mxu0 0
    %1134 = vmatpush1.bf16.msra.mxu0 0
    %1135 = vmatprep.subr.bf16.mxu0 0
    %1136 = vmatpush1.bf16.msra.mxu0 0
    %1137 = vmatprep.subr.bf16.mxu0 0
    %1138 = vmatpush1.bf16.msra.mxu0 0
    %1139 = vmatprep.subr.bf16.mxu0 0
    %1140 = vmatpush1.bf16.msra.mxu0 0
    %1141 = vmatprep.mubr.bf16.mxu0 0
    %1142 = vmatmul.mubr.bf16.gmra.mrb[0].mxu0 %v1107
    %v1143 = vpop.f32.mrb[0].mxu0
    %v1144 = vadd.f32 %v1093, %v1143
    %v1145 = vpop.f32.mrb[0].mxu0
    %v1146 = vpop.f32.mrb[0].mxu0
    %v1147 = vadd.f32 %v1093, %v1146
    %v1148 = vpop.f32.mrb[0].mxu0
    %1149 = vdwg.mxu0
    %v1150 = vpack.c.bf16 %v1144, %v1144
    %v1151 = vpack.c.bf16 %v1147, %v1147
    %1153 = vrot.lane.b32.xlu0 %v1150, 112
    %v1154 = vpop.permute.xlu0 %1153
    %v1156 = vsel %vm284, %v1150, 0
    %v1159 = vsel %vm284, %v1154, 0
    %1161 = vmatprep.subr.bf16.mxu0 0
    %1162 = vmatpush1.bf16.xpose.msra.mxu0 %v1159
    %1163 = vmatprep.subr.bf16.mxu0 0
    %1164 = vmatpush1.bf16.xpose.msra.mxu0 0
    %1165 = vmatprep.subr.bf16.mxu0 0
    %1166 = vmatpush1.bf16.xpose.msra.mxu0 0
    %1167 = vmatprep.subr.bf16.mxu0 0
    %1168 = vmatpush1.bf16.xpose.msra.mxu0 0
    %1169 = vmatprep.subr.bf16.mxu0 0
    %1170 = vmatpush1.bf16.xpose.msra.mxu0 0
    %1171 = vmatprep.subr.bf16.mxu0 0
    %1172 = vmatpush1.bf16.xpose.msra.mxu0 0
    %1173 = vmatprep.subr.bf16.mxu0 0
    %1174 = vmatpush1.bf16.xpose.msra.mxu0 0
    %1175 = vmatprep.subr.bf16.mxu0 0
    %1176 = vmatpush1.bf16.xpose.msra.mxu0 0
    %1177 = vmatprep.subr.bf16.mxu0 0
    %1178 = vmatpush1.bf16.xpose.msra.mxu0 0
    %1179 = vmatprep.subr.bf16.mxu0 0
    %1180 = vmatpush1.bf16.xpose.msra.mxu0 0
    %1181 = vmatprep.subr.bf16.mxu0 0
    %1182 = vmatpush1.bf16.xpose.msra.mxu0 0
    %1183 = vmatprep.subr.bf16.mxu0 0
    %1184 = vmatpush1.bf16.xpose.msra.mxu0 0
    %1185 = vmatprep.subr.bf16.mxu0 0
    %1186 = vmatpush1.bf16.xpose.msra.mxu0 0
    %1187 = vmatprep.subr.bf16.mxu0 0
    %1188 = vmatpush1.bf16.xpose.msra.mxu0 0
    %1189 = vmatprep.subr.bf16.mxu0 0
    %1190 = vmatpush1.bf16.xpose.msra.mxu0 0
    %1191 = vmatprep.subr.bf16.mxu0 0
    %1192 = vmatpush1.bf16.xpose.msra.mxu0 0
    %1193 = vmatprep.mubr.bf16.mxu0 0
    %1194 = vmatmul.mubr.bf16.gmra.mrb[0].mxu0 %v1156
    %v1195 = vpop.f32.mrb[0].mxu0
    %v1196 = vadd.f32 %v201, %v1195
    %v1197 = vpop.f32.mrb[0].mxu0
    %v1198 = vpop.f32.mrb[0].mxu0
    %v1199 = vpop.f32.mrb[0].mxu0
    %1200 = vdwg.mxu0
    %1202 = vrot.lane.b32.xlu0 %v1151, 112
    %v1203 = vpop.permute.xlu0 %1202
    %v1205 = vsel %vm284, %v1151, 0
    %v1208 = vsel %vm284, %v1203, 0
    %1210 = vmatprep.subr.bf16.mxu0 0
    %1211 = vmatpush1.bf16.xpose.msra.mxu0 %v1208
    %1212 = vmatprep.subr.bf16.mxu0 0
    %1213 = vmatpush1.bf16.xpose.msra.mxu0 0
    %1214 = vmatprep.subr.bf16.mxu0 0
    %1215 = vmatpush1.bf16.xpose.msra.mxu0 0
    %1216 = vmatprep.subr.bf16.mxu0 0
    %1217 = vmatpush1.bf16.xpose.msra.mxu0 0
    %1218 = vmatprep.subr.bf16.mxu0 0
    %1219 = vmatpush1.bf16.xpose.msra.mxu0 0
    %1220 = vmatprep.subr.bf16.mxu0 0
    %1221 = vmatpush1.bf16.xpose.msra.mxu0 0
    %1222 = vmatprep.subr.bf16.mxu0 0
    %1223 = vmatpush1.bf16.xpose.msra.mxu0 0
    %1224 = vmatprep.subr.bf16.mxu0 0
    %1225 = vmatpush1.bf16.xpose.msra.mxu0 0
    %1226 = vmatprep.subr.bf16.mxu0 0
    %1227 = vmatpush1.bf16.xpose.msra.mxu0 0
    %1228 = vmatprep.subr.bf16.mxu0 0
    %1229 = vmatpush1.bf16.xpose.msra.mxu0 0
    %1230 = vmatprep.subr.bf16.mxu0 0
    %1231 = vmatpush1.bf16.xpose.msra.mxu0 0
    %1232 = vmatprep.subr.bf16.mxu0 0
    %1233 = vmatpush1.bf16.xpose.msra.mxu0 0
    %1234 = vmatprep.subr.bf16.mxu0 0
    %1235 = vmatpush1.bf16.xpose.msra.mxu0 0
    %1236 = vmatprep.subr.bf16.mxu0 0
    %1237 = vmatpush1.bf16.xpose.msra.mxu0 0
    %1238 = vmatprep.subr.bf16.mxu0 0
    %1239 = vmatpush1.bf16.xpose.msra.mxu0 0
    %1240 = vmatprep.subr.bf16.mxu0 0
    %1241 = vmatpush1.bf16.xpose.msra.mxu0 0
    %1242 = vmatprep.mubr.bf16.mxu0 0
    %1243 = vmatmul.mubr.bf16.gmra.mrb[0].mxu0 %v1205
    %v1244 = vpop.f32.mrb[0].mxu0
    %v1245 = vadd.f32 %v205, %v1244
    %v1246 = vpop.f32.mrb[0].mxu0
    %v1247 = vpop.f32.mrb[0].mxu0
    %v1248 = vpop.f32.mrb[0].mxu0
    %1249 = vdwg.mxu0
    %v1250 = vsel %vm380, %v1196, -inf
    %1251 = vmax.xlane.f32.xlu0 %v1250
    %v1252 = vpop.xlane.xlu0 %1251
    %v1253 = vsel %vm380, %v1245, -inf
    %1254 = vmax.xlane.f32.xlu0 %v1253
    %v1255 = vpop.xlane.xlu0 %1254
    %v1256 = vsub.f32 %v1196, %v1252
    %v1257 = vsub.f32 %v1245, %v1255
    %v1258 = vmul.f32 %v1256, 1.442695
    %v1259 = vpow.pop %v1258
    %v1260 = vmul.f32 %v1257, 1.442695
    %v1261 = vpow.pop %v1260
    %v1262 = vsel %vm380, %v1259, 0.0
    %1263 = vadd.xlane.f32.xlu0 %v1262
    %v1264 = vpop.xlane.xlu0 %1263
    %v1265 = vsel %vm380, %v1261, 0.0
    %1266 = vadd.xlane.f32.xlu0 %v1265
    %v1267 = vpop.xlane.xlu0 %1266
    %v1268 = vrcp.pop %v1264
    %v1269 = vrcp.pop %v1267
    %v1270 = vmul.f32 %v1259, %v1268
    %v1271 = vmul.f32 %v1261, %v1269
    %v1272 = vpack.c.bf16 %v1270, %v1270
    %v1273 = vpack.c.bf16 %v1271, %v1271
    %1274 = vrot.lane.b32.xlu0 %v1150, 96
    %v1275 = vpop.permute.xlu0 %1274
    %v1277 = vsel %vm380, %v1272, 0
    %v1280 = vsel %vm410, %v1275, 0
    %1282 = vmatprep.subr.bf16.mxu0 0
    %1283 = vmatpush1.bf16.msra.mxu0 %v1280
    %1284 = vmatprep.subr.bf16.mxu0 0
    %1285 = vmatpush1.bf16.msra.mxu0 0
    %1286 = vmatprep.subr.bf16.mxu0 0
    %1287 = vmatpush1.bf16.msra.mxu0 0
    %1288 = vmatprep.subr.bf16.mxu0 0
    %1289 = vmatpush1.bf16.msra.mxu0 0
    %1290 = vmatprep.subr.bf16.mxu0 0
    %1291 = vmatpush1.bf16.msra.mxu0 0
    %1292 = vmatprep.subr.bf16.mxu0 0
    %1293 = vmatpush1.bf16.msra.mxu0 0
    %1294 = vmatprep.subr.bf16.mxu0 0
    %1295 = vmatpush1.bf16.msra.mxu0 0
    %1296 = vmatprep.subr.bf16.mxu0 0
    %1297 = vmatpush1.bf16.msra.mxu0 0
    %1298 = vmatprep.subr.bf16.mxu0 0
    %1299 = vmatpush1.bf16.msra.mxu0 0
    %1300 = vmatprep.subr.bf16.mxu0 0
    %1301 = vmatpush1.bf16.msra.mxu0 0
    %1302 = vmatprep.subr.bf16.mxu0 0
    %1303 = vmatpush1.bf16.msra.mxu0 0
    %1304 = vmatprep.subr.bf16.mxu0 0
    %1305 = vmatpush1.bf16.msra.mxu0 0
    %1306 = vmatprep.subr.bf16.mxu0 0
    %1307 = vmatpush1.bf16.msra.mxu0 0
    %1308 = vmatprep.subr.bf16.mxu0 0
    %1309 = vmatpush1.bf16.msra.mxu0 0
    %1310 = vmatprep.subr.bf16.mxu0 0
    %1311 = vmatpush1.bf16.msra.mxu0 0
    %1312 = vmatprep.subr.bf16.mxu0 0
    %1313 = vmatpush1.bf16.msra.mxu0 0
    %1314 = vmatprep.mubr.bf16.mxu0 0
    %1315 = vmatmul.mubr.bf16.gmra.mrb[0].mxu0 %v1277
    %v1316 = vpop.f32.mrb[0].mxu0
    %v1317 = vadd.f32 0.0, %v1316
    %v1318 = vpop.f32.mrb[0].mxu0
    %v1319 = vpop.f32.mrb[0].mxu0
    %v1320 = vpop.f32.mrb[0].mxu0
    %1321 = vdwg.mxu0
    %1322 = vrot.lane.b32.xlu0 %v1151, 96
    %v1323 = vpop.permute.xlu0 %1322
    %v1325 = vsel %vm380, %v1273, 0
    %v1328 = vsel %vm410, %v1323, 0
    %1330 = vmatprep.subr.bf16.mxu0 0
    %1331 = vmatpush1.bf16.msra.mxu0 %v1328
    %1332 = vmatprep.subr.bf16.mxu0 0
    %1333 = vmatpush1.bf16.msra.mxu0 0
    %1334 = vmatprep.subr.bf16.mxu0 0
    %1335 = vmatpush1.bf16.msra.mxu0 0
    %1336 = vmatprep.subr.bf16.mxu0 0
    %1337 = vmatpush1.bf16.msra.mxu0 0
    %1338 = vmatprep.subr.bf16.mxu0 0
    %1339 = vmatpush1.bf16.msra.mxu0 0
    %1340 = vmatprep.subr.bf16.mxu0 0
    %1341 = vmatpush1.bf16.msra.mxu0 0
    %1342 = vmatprep.subr.bf16.mxu0 0
    %1343 = vmatpush1.bf16.msra.mxu0 0
    %1344 = vmatprep.subr.bf16.mxu0 0
    %1345 = vmatpush1.bf16.msra.mxu0 0
    %1346 = vmatprep.subr.bf16.mxu0 0
    %1347 = vmatpush1.bf16.msra.mxu0 0
    %1348 = vmatprep.subr.bf16.mxu0 0
    %1349 = vmatpush1.bf16.msra.mxu0 0
    %1350 = vmatprep.subr.bf16.mxu0 0
    %1351 = vmatpush1.bf16.msra.mxu0 0
    %1352 = vmatprep.subr.bf16.mxu0 0
    %1353 = vmatpush1.bf16.msra.mxu0 0
    %1354 = vmatprep.subr.bf16.mxu0 0
    %1355 = vmatpush1.bf16.msra.mxu0 0
    %1356 = vmatprep.subr.bf16.mxu0 0
    %1357 = vmatpush1.bf16.msra.mxu0 0
    %1358 = vmatprep.subr.bf16.mxu0 0
    %1359 = vmatpush1.bf16.msra.mxu0 0
    %1360 = vmatprep.subr.bf16.mxu0 0
    %1361 = vmatpush1.bf16.msra.mxu0 0
    %1362 = vmatprep.mubr.bf16.mxu0 0
    %1363 = vmatmul.mubr.bf16.gmra.mrb[0].mxu0 %v1325
    %v1364 = vpop.f32.mrb[0].mxu0
    %v1365 = vadd.f32 0.0, %v1364
    %v1366 = vpop.f32.mrb[0].mxu0
    %v1367 = vpop.f32.mrb[0].mxu0
    %v1368 = vpop.f32.mrb[0].mxu0
    %1369 = vdwg.mxu0
    %v1370 = vpack.c.bf16 %v1365, %v1317
    %1371 = vrot.lane.b32.xlu0 %v1150, 80
    %v1372 = vpop.permute.xlu0 %1371
    %1373 = vrot.lane.b32.xlu0 %v1150, 64
    %v1374 = vpop.permute.xlu0 %1373
    %v1376 = vsel %vm284, %v1372, 0
    %v1379 = vsel %vm284, %v1374, 0
    %1381 = vmatprep.subr.bf16.mxu0 0
    %1382 = vmatpush1.bf16.xpose.msra.mxu0 %v1379
    %1383 = vmatprep.subr.bf16.mxu0 0
    %1384 = vmatpush1.bf16.xpose.msra.mxu0 0
    %1385 = vmatprep.subr.bf16.mxu0 0
    %1386 = vmatpush1.bf16.xpose.msra.mxu0 0
    %1387 = vmatprep.subr.bf16.mxu0 0
    %1388 = vmatpush1.bf16.xpose.msra.mxu0 0
    %1389 = vmatprep.subr.bf16.mxu0 0
    %1390 = vmatpush1.bf16.xpose.msra.mxu0 0
    %1391 = vmatprep.subr.bf16.mxu0 0
    %1392 = vmatpush1.bf16.xpose.msra.mxu0 0
    %1393 = vmatprep.subr.bf16.mxu0 0
    %1394 = vmatpush1.bf16.xpose.msra.mxu0 0
    %1395 = vmatprep.subr.bf16.mxu0 0
    %1396 = vmatpush1.bf16.xpose.msra.mxu0 0
    %1397 = vmatprep.subr.bf16.mxu0 0
    %1398 = vmatpush1.bf16.xpose.msra.mxu0 0
    %1399 = vmatprep.subr.bf16.mxu0 0
    %1400 = vmatpush1.bf16.xpose.msra.mxu0 0
    %1401 = vmatprep.subr.bf16.mxu0 0
    %1402 = vmatpush1.bf16.xpose.msra.mxu0 0
    %1403 = vmatprep.subr.bf16.mxu0 0
    %1404 = vmatpush1.bf16.xpose.msra.mxu0 0
    %1405 = vmatprep.subr.bf16.mxu0 0
    %1406 = vmatpush1.bf16.xpose.msra.mxu0 0
    %1407 = vmatprep.subr.bf16.mxu0 0
    %1408 = vmatpush1.bf16.xpose.msra.mxu0 0
    %1409 = vmatprep.subr.bf16.mxu0 0
    %1410 = vmatpush1.bf16.xpose.msra.mxu0 0
    %1411 = vmatprep.subr.bf16.mxu0 0
    %1412 = vmatpush1.bf16.xpose.msra.mxu0 0
    %1413 = vmatprep.mubr.bf16.mxu0 0
    %1414 = vmatmul.mubr.bf16.gmra.mrb[0].mxu0 %v1376
    %v1415 = vpop.f32.mrb[0].mxu0
    %v1416 = vadd.f32 %v201, %v1415
    %v1417 = vpop.f32.mrb[0].mxu0
    %v1418 = vpop.f32.mrb[0].mxu0
    %v1419 = vpop.f32.mrb[0].mxu0
    %1420 = vdwg.mxu0
    %1421 = vrot.lane.b32.xlu0 %v1151, 80
    %v1422 = vpop.permute.xlu0 %1421
    %1423 = vrot.lane.b32.xlu0 %v1151, 64
    %v1424 = vpop.permute.xlu0 %1423
    %v1426 = vsel %vm284, %v1422, 0
    %v1429 = vsel %vm284, %v1424, 0
    %1431 = vmatprep.subr.bf16.mxu0 0
    %1432 = vmatpush1.bf16.xpose.msra.mxu0 %v1429
    %1433 = vmatprep.subr.bf16.mxu0 0
    %1434 = vmatpush1.bf16.xpose.msra.mxu0 0
    %1435 = vmatprep.subr.bf16.mxu0 0
    %1436 = vmatpush1.bf16.xpose.msra.mxu0 0
    %1437 = vmatprep.subr.bf16.mxu0 0
    %1438 = vmatpush1.bf16.xpose.msra.mxu0 0
    %1439 = vmatprep.subr.bf16.mxu0 0
    %1440 = vmatpush1.bf16.xpose.msra.mxu0 0
    %1441 = vmatprep.subr.bf16.mxu0 0
    %1442 = vmatpush1.bf16.xpose.msra.mxu0 0
    %1443 = vmatprep.subr.bf16.mxu0 0
    %1444 = vmatpush1.bf16.xpose.msra.mxu0 0
    %1445 = vmatprep.subr.bf16.mxu0 0
    %1446 = vmatpush1.bf16.xpose.msra.mxu0 0
    %1447 = vmatprep.subr.bf16.mxu0 0
    %1448 = vmatpush1.bf16.xpose.msra.mxu0 0
    %1449 = vmatprep.subr.bf16.mxu0 0
    %1450 = vmatpush1.bf16.xpose.msra.mxu0 0
    %1451 = vmatprep.subr.bf16.mxu0 0
    %1452 = vmatpush1.bf16.xpose.msra.mxu0 0
    %1453 = vmatprep.subr.bf16.mxu0 0
    %1454 = vmatpush1.bf16.xpose.msra.mxu0 0
    %1455 = vmatprep.subr.bf16.mxu0 0
    %1456 = vmatpush1.bf16.xpose.msra.mxu0 0
    %1457 = vmatprep.subr.bf16.mxu0 0
    %1458 = vmatpush1.bf16.xpose.msra.mxu0 0
    %1459 = vmatprep.subr.bf16.mxu0 0
    %1460 = vmatpush1.bf16.xpose.msra.mxu0 0
    %1461 = vmatprep.subr.bf16.mxu0 0
    %1462 = vmatpush1.bf16.xpose.msra.mxu0 0
    %1463 = vmatprep.mubr.bf16.mxu0 0
    %1464 = vmatmul.mubr.bf16.gmra.mrb[0].mxu0 %v1426
    %v1465 = vpop.f32.mrb[0].mxu0
    %v1466 = vadd.f32 %v205, %v1465
    %v1467 = vpop.f32.mrb[0].mxu0
    %v1468 = vpop.f32.mrb[0].mxu0
    %v1469 = vpop.f32.mrb[0].mxu0
    %1470 = vdwg.mxu0
    %v1471 = vsel %vm380, %v1416, -inf
    %1472 = vmax.xlane.f32.xlu0 %v1471
    %v1473 = vpop.xlane.xlu0 %1472
    %v1474 = vsel %vm380, %v1466, -inf
    %1475 = vmax.xlane.f32.xlu0 %v1474
    %v1476 = vpop.xlane.xlu0 %1475
    %v1477 = vsub.f32 %v1416, %v1473
    %v1478 = vsub.f32 %v1466, %v1476
    %v1479 = vmul.f32 %v1477, 1.442695
    %v1480 = vpow.pop %v1479
    %v1481 = vmul.f32 %v1478, 1.442695
    %v1482 = vpow.pop %v1481
    %v1483 = vsel %vm380, %v1480, 0.0
    %1484 = vadd.xlane.f32.xlu0 %v1483
    %v1485 = vpop.xlane.xlu0 %1484
    %v1486 = vsel %vm380, %v1482, 0.0
    %1487 = vadd.xlane.f32.xlu0 %v1486
    %v1488 = vpop.xlane.xlu0 %1487
    %v1489 = vrcp.pop %v1485
    %v1490 = vrcp.pop %v1488
    %v1491 = vmul.f32 %v1480, %v1489
    %v1492 = vmul.f32 %v1482, %v1490
    %v1493 = vpack.c.bf16 %v1491, %v1491
    %v1494 = vpack.c.bf16 %v1492, %v1492
    %1495 = vrot.lane.b32.xlu0 %v1150, 48
    %v1496 = vpop.permute.xlu0 %1495
    %v1498 = vsel %vm380, %v1493, 0
    %v1501 = vsel %vm410, %v1496, 0
    %1503 = vmatprep.subr.bf16.mxu0 0
    %1504 = vmatpush1.bf16.msra.mxu0 %v1501
    %1505 = vmatprep.subr.bf16.mxu0 0
    %1506 = vmatpush1.bf16.msra.mxu0 0
    %1507 = vmatprep.subr.bf16.mxu0 0
    %1508 = vmatpush1.bf16.msra.mxu0 0
    %1509 = vmatprep.subr.bf16.mxu0 0
    %1510 = vmatpush1.bf16.msra.mxu0 0
    %1511 = vmatprep.subr.bf16.mxu0 0
    %1512 = vmatpush1.bf16.msra.mxu0 0
    %1513 = vmatprep.subr.bf16.mxu0 0
    %1514 = vmatpush1.bf16.msra.mxu0 0
    %1515 = vmatprep.subr.bf16.mxu0 0
    %1516 = vmatpush1.bf16.msra.mxu0 0
    %1517 = vmatprep.subr.bf16.mxu0 0
    %1518 = vmatpush1.bf16.msra.mxu0 0
    %1519 = vmatprep.subr.bf16.mxu0 0
    %1520 = vmatpush1.bf16.msra.mxu0 0
    %1521 = vmatprep.subr.bf16.mxu0 0
    %1522 = vmatpush1.bf16.msra.mxu0 0
    %1523 = vmatprep.subr.bf16.mxu0 0
    %1524 = vmatpush1.bf16.msra.mxu0 0
    %1525 = vmatprep.subr.bf16.mxu0 0
    %1526 = vmatpush1.bf16.msra.mxu0 0
    %1527 = vmatprep.subr.bf16.mxu0 0
    %1528 = vmatpush1.bf16.msra.mxu0 0
    %1529 = vmatprep.subr.bf16.mxu0 0
    %1530 = vmatpush1.bf16.msra.mxu0 0
    %1531 = vmatprep.subr.bf16.mxu0 0
    %1532 = vmatpush1.bf16.msra.mxu0 0
    %1533 = vmatprep.subr.bf16.mxu0 0
    %1534 = vmatpush1.bf16.msra.mxu0 0
    %1535 = vmatprep.mubr.bf16.mxu0 0
    %1536 = vmatmul.mubr.bf16.gmra.mrb[0].mxu0 %v1498
    %v1537 = vpop.f32.mrb[0].mxu0
    %v1538 = vadd.f32 0.0, %v1537
    %v1539 = vpop.f32.mrb[0].mxu0
    %v1540 = vpop.f32.mrb[0].mxu0
    %v1541 = vpop.f32.mrb[0].mxu0
    %1542 = vdwg.mxu0
    %1543 = vrot.lane.b32.xlu0 %v1151, 48
    %v1544 = vpop.permute.xlu0 %1543
    %v1546 = vsel %vm380, %v1494, 0
    %v1549 = vsel %vm410, %v1544, 0
    %1551 = vmatprep.subr.bf16.mxu0 0
    %1552 = vmatpush1.bf16.msra.mxu0 %v1549
    %1553 = vmatprep.subr.bf16.mxu0 0
    %1554 = vmatpush1.bf16.msra.mxu0 0
    %1555 = vmatprep.subr.bf16.mxu0 0
    %1556 = vmatpush1.bf16.msra.mxu0 0
    %1557 = vmatprep.subr.bf16.mxu0 0
    %1558 = vmatpush1.bf16.msra.mxu0 0
    %1559 = vmatprep.subr.bf16.mxu0 0
    %1560 = vmatpush1.bf16.msra.mxu0 0
    %1561 = vmatprep.subr.bf16.mxu0 0
    %1562 = vmatpush1.bf16.msra.mxu0 0
    %1563 = vmatprep.subr.bf16.mxu0 0
    %1564 = vmatpush1.bf16.msra.mxu0 0
    %1565 = vmatprep.subr.bf16.mxu0 0
    %1566 = vmatpush1.bf16.msra.mxu0 0
    %1567 = vmatprep.subr.bf16.mxu0 0
    %1568 = vmatpush1.bf16.msra.mxu0 0
    %1569 = vmatprep.subr.bf16.mxu0 0
    %1570 = vmatpush1.bf16.msra.mxu0 0
    %1571 = vmatprep.subr.bf16.mxu0 0
    %1572 = vmatpush1.bf16.msra.mxu0 0
    %1573 = vmatprep.subr.bf16.mxu0 0
    %1574 = vmatpush1.bf16.msra.mxu0 0
    %1575 = vmatprep.subr.bf16.mxu0 0
    %1576 = vmatpush1.bf16.msra.mxu0 0
    %1577 = vmatprep.subr.bf16.mxu0 0
    %1578 = vmatpush1.bf16.msra.mxu0 0
    %1579 = vmatprep.subr.bf16.mxu0 0
    %1580 = vmatpush1.bf16.msra.mxu0 0
    %1581 = vmatprep.subr.bf16.mxu0 0
    %1582 = vmatpush1.bf16.msra.mxu0 0
    %1583 = vmatprep.mubr.bf16.mxu0 0
    %1584 = vmatmul.mubr.bf16.gmra.mrb[0].mxu0 %v1546
    %v1585 = vpop.f32.mrb[0].mxu0
    %v1586 = vadd.f32 0.0, %v1585
    %v1587 = vpop.f32.mrb[0].mxu0
    %v1588 = vpop.f32.mrb[0].mxu0
    %v1589 = vpop.f32.mrb[0].mxu0
    %1590 = vdwg.mxu0
    %v1591 = vpack.c.bf16 %v1586, %v1538
    %v1594 = vunpack.c.l.b16 %v1082
    %v1595 = vunpack.c.l.b16 %v1083
    %v1596 = vpack.c.b16 %v1595, %v1594
    %v1599 = vsel %vm284, %v1591, 0
    %1601 = vmatprep.subr.bf16.mxu0 0
    %1602 = vmatpush1.bf16.msra.mxu0 %v1596
    %1603 = vmatprep.subr.bf16.mxu0 0
    %1604 = vmatpush1.bf16.msra.mxu0 0
    %1605 = vmatprep.subr.bf16.mxu0 0
    %1606 = vmatpush1.bf16.msra.mxu0 0
    %1607 = vmatprep.subr.bf16.mxu0 0
    %1608 = vmatpush1.bf16.msra.mxu0 0
    %1609 = vmatprep.subr.bf16.mxu0 0
    %1610 = vmatpush1.bf16.msra.mxu0 0
    %1611 = vmatprep.subr.bf16.mxu0 0
    %1612 = vmatpush1.bf16.msra.mxu0 0
    %1613 = vmatprep.subr.bf16.mxu0 0
    %1614 = vmatpush1.bf16.msra.mxu0 0
    %1615 = vmatprep.subr.bf16.mxu0 0
    %1616 = vmatpush1.bf16.msra.mxu0 0
    %1617 = vmatprep.subr.bf16.mxu0 0
    %1618 = vmatpush1.bf16.msra.mxu0 0
    %1619 = vmatprep.subr.bf16.mxu0 0
    %1620 = vmatpush1.bf16.msra.mxu0 0
    %1621 = vmatprep.subr.bf16.mxu0 0
    %1622 = vmatpush1.bf16.msra.mxu0 0
    %1623 = vmatprep.subr.bf16.mxu0 0
    %1624 = vmatpush1.bf16.msra.mxu0 0
    %1625 = vmatprep.subr.bf16.mxu0 0
    %1626 = vmatpush1.bf16.msra.mxu0 0
    %1627 = vmatprep.subr.bf16.mxu0 0
    %1628 = vmatpush1.bf16.msra.mxu0 0
    %1629 = vmatprep.subr.bf16.mxu0 0
    %1630 = vmatpush1.bf16.msra.mxu0 0
    %1631 = vmatprep.subr.bf16.mxu0 0
    %1632 = vmatpush1.bf16.msra.mxu0 0
    %1633 = vmatprep.mubr.bf16.mxu0 0
    %1634 = vmatmul.mubr.bf16.gmra.mrb[0].mxu0 %v1599
    %v1635 = vpop.f32.mrb[0].mxu0
    %v1636 = vadd.f32 0.0, %v1635
    %v1637 = vpop.f32.mrb[0].mxu0
    %v1638 = vpop.f32.mrb[0].mxu0
    %v1639 = vadd.f32 0.0, %v1638
    %v1640 = vpop.f32.mrb[0].mxu0
    %1641 = vdwg.mxu0
    %v1644 = vunpack.c.l.b16 %v1080
    %v1645 = vunpack.c.l.b16 %v1081
    %v1646 = vpack.c.b16 %v1645, %v1644
    %v1649 = vsel %vm284, %v1370, 0
    %1651 = vmatprep.subr.bf16.mxu0 0
    %1652 = vmatpush1.bf16.msra.mxu0 %v1646
    %1653 = vmatprep.subr.bf16.mxu0 0
    %1654 = vmatpush1.bf16.msra.mxu0 0
    %1655 = vmatprep.subr.bf16.mxu0 0
    %1656 = vmatpush1.bf16.msra.mxu0 0
    %1657 = vmatprep.subr.bf16.mxu0 0
    %1658 = vmatpush1.bf16.msra.mxu0 0
    %1659 = vmatprep.subr.bf16.mxu0 0
    %1660 = vmatpush1.bf16.msra.mxu0 0
    %1661 = vmatprep.subr.bf16.mxu0 0
    %1662 = vmatpush1.bf16.msra.mxu0 0
    %1663 = vmatprep.subr.bf16.mxu0 0
    %1664 = vmatpush1.bf16.msra.mxu0 0
    %1665 = vmatprep.subr.bf16.mxu0 0
    %1666 = vmatpush1.bf16.msra.mxu0 0
    %1667 = vmatprep.subr.bf16.mxu0 0
    %1668 = vmatpush1.bf16.msra.mxu0 0
    %1669 = vmatprep.subr.bf16.mxu0 0
    %1670 = vmatpush1.bf16.msra.mxu0 0
    %1671 = vmatprep.subr.bf16.mxu0 0
    %1672 = vmatpush1.bf16.msra.mxu0 0
    %1673 = vmatprep.subr.bf16.mxu0 0
    %1674 = vmatpush1.bf16.msra.mxu0 0
    %1675 = vmatprep.subr.bf16.mxu0 0
    %1676 = vmatpush1.bf16.msra.mxu0 0
    %1677 = vmatprep.subr.bf16.mxu0 0
    %1678 = vmatpush1.bf16.msra.mxu0 0
    %1679 = vmatprep.subr.bf16.mxu0 0
    %1680 = vmatpush1.bf16.msra.mxu0 0
    %1681 = vmatprep.subr.bf16.mxu0 0
    %1682 = vmatpush1.bf16.msra.mxu0 0
    %1683 = vmatprep.mubr.bf16.mxu0 0
    %1684 = vmatmul.mubr.bf16.gmra.mrb[0].mxu0 %v1649
    %v1685 = vpop.f32.mrb[0].mxu0
    %v1686 = vadd.f32 %v1636, %v1685
    %v1687 = vpop.f32.mrb[0].mxu0
    %v1688 = vpop.f32.mrb[0].mxu0
    %v1689 = vadd.f32 %v1639, %v1688
    %v1690 = vpop.f32.mrb[0].mxu0
    %1691 = vdwg.mxu0
    %v1692 = vadd.f32 %v1073, %v1686
    %v1693 = vadd.f32 %v1074, %v1689
    %v1694 = vlaneseq
    %v1695 = vshrl.u32 %v1694, 7
    %v1696 = vsub.s32 1, %v1695
    %v1697 = vrot.slane %v1076, %v1696
    %v1698 = vadd.f32 %v1692, %v1697
    %v1699 = vadd.f32 %v1693, %v1697
    %v1700 = vsel %vm150, %v1698, 0.0
    %1701 = vadd.xlane.f32.xlu0 %v1700
    %v1702 = vpop.xlane.xlu0 %1701
    %v1703 = vsel %vm150, %v1699, 0.0
    %1704 = vadd.xlane.f32.xlu0 %v1703
    %v1705 = vpop.xlane.xlu0 %1704
    %v1706 = vmul.f32 %v1702, %v157
    %v1707 = vmul.f32 %v1705, %v157
    %v1708 = vsub.f32 %v1698, %v1706
    %v1709 = vsub.f32 %v1699, %v1707
    %v1710 = vmul.f32 %v1708, %v1708
    %v1711 = vmul.f32 %v1709, %v1709
    %v1712 = vsel %vm150, %v1710, 0.0
    %1713 = vadd.xlane.f32.xlu0 %v1712
    %v1714 = vpop.xlane.xlu0 %1713
    %v1715 = vsel %vm150, %v1711, 0.0
    %1716 = vadd.xlane.f32.xlu0 %v1715
    %v1717 = vpop.xlane.xlu0 %1716
    %v1718 = vmul.f32 %v1714, %v157
    %v1719 = vmul.f32 %v1717, %v157
    %v1720 = vadd.f32 %v1718, 1e-12
    %v1721 = vadd.f32 %v1719, 1e-12
    %v1722 = vrsqrt.pop %v1720
    %v1723 = vrsqrt.pop %v1721
    %v1724 = vmul.f32 %v1708, %v1722
    %v1725 = vmul.f32 %v1709, %v1723
    %v1726 = vlaneseq
    %v1727 = vshrl.u32 %v1726, 7
    %v1728 = vsub.s32 0, %v1727
    %v1729 = vrot.slane %v1078, %v1728
    %v1730 = vmul.f32 %v1724, %v1729
    %v1731 = vmul.f32 %v1725, %v1729
    %v1732 = vlaneseq
    %v1733 = vshrl.u32 %v1732, 7
    %v1734 = vsub.s32 1, %v1733
    %v1735 = vrot.slane %v1078, %v1734
    %v1736 = vadd.f32 %v1730, %v1735
    %v1737 = vadd.f32 %v1731, %v1735
    %v1738 = vpack.c.bf16 %v1737, %v1736
    %s1739 = scalar_lea.vmem %s7, 16
    %v1740 = vld [vmem:[%s1739] sm:$0xf]
    %v1741 = vld [vmem:[%s1739 + $0x4] sm:$0xf]
    %v1742 = vld [vmem:[%s1739 + $0x8] sm:$0xf]
    %v1743 = vld [vmem:[%s1739 + $0xc] sm:$0xf]
    %v1744 = vlaneseq
    %v1745 = vshrl.u32 %v1744, 7
    %v1746 = vsub.s32 2, %v1745
    %v1747 = vrot.slane %v1076, %v1746
    %v1752 = vunpack.c.l.b16 %v1740
    %v1753 = vunpack.c.l.b16 %v1741
    %v1754 = vunpack.c.l.b16 %v1742
    %v1755 = vunpack.c.l.b16 %v1743
    %v1756 = vpack.c.b16 %v1753, %v1752
    %v1757 = vpack.c.b16 %v1755, %v1754
    %v1761 = vsel %vm150, %v1738, 0
    %1763 = vmatprep.subr.bf16.mxu0 0
    %1764 = vmatpush1.bf16.msra.mxu0 %v1756
    %1765 = vmatprep.subr.bf16.mxu0 0
    %1766 = vmatpush1.bf16.msra.mxu0 %v1757
    %1767 = vmatprep.subr.bf16.mxu0 0
    %1768 = vmatpush1.bf16.msra.mxu0 0
    %1769 = vmatprep.subr.bf16.mxu0 0
    %1770 = vmatpush1.bf16.msra.mxu0 0
    %1771 = vmatprep.subr.bf16.mxu0 0
    %1772 = vmatpush1.bf16.msra.mxu0 0
    %1773 = vmatprep.subr.bf16.mxu0 0
    %1774 = vmatpush1.bf16.msra.mxu0 0
    %1775 = vmatprep.subr.bf16.mxu0 0
    %1776 = vmatpush1.bf16.msra.mxu0 0
    %1777 = vmatprep.subr.bf16.mxu0 0
    %1778 = vmatpush1.bf16.msra.mxu0 0
    %1779 = vmatprep.subr.bf16.mxu0 0
    %1780 = vmatpush1.bf16.msra.mxu0 0
    %1781 = vmatprep.subr.bf16.mxu0 0
    %1782 = vmatpush1.bf16.msra.mxu0 0
    %1783 = vmatprep.subr.bf16.mxu0 0
    %1784 = vmatpush1.bf16.msra.mxu0 0
    %1785 = vmatprep.subr.bf16.mxu0 0
    %1786 = vmatpush1.bf16.msra.mxu0 0
    %1787 = vmatprep.subr.bf16.mxu0 0
    %1788 = vmatpush1.bf16.msra.mxu0 0
    %1789 = vmatprep.subr.bf16.mxu0 0
    %1790 = vmatpush1.bf16.msra.mxu0 0
    %1791 = vmatprep.subr.bf16.mxu0 0
    %1792 = vmatpush1.bf16.msra.mxu0 0
    %1793 = vmatprep.subr.bf16.mxu0 0
    %1794 = vmatpush1.bf16.msra.mxu0 0
    %1795 = vmatprep.mubr.bf16.mxu0 0
    %1796 = vmatmul.mubr.bf16.gmra.mrb[0].mxu0 %v1761
    %v1797 = vpop.f32.mrb[0].mxu0
    %v1798 = vadd.f32 %v1747, %v1797
    %v1799 = vpop.f32.mrb[0].mxu0
    %v1800 = vpop.f32.mrb[0].mxu0
    %v1801 = vadd.f32 %v1747, %v1800
    %v1802 = vpop.f32.mrb[0].mxu0
    %1803 = vdwg.mxu0
    %v1804 = vmul.f32 %v1798, 0.5
    %v1805 = vmul.f32 %v1801, 0.5
    %v1806 = vmul.f32 %v1798, 0.044715
    %v1807 = vmul.f32 %v1801, 0.044715
    %v1808 = vmul.f32 %v1806, %v1798
    %v1809 = vmul.f32 %v1807, %v1801
    %v1810 = vmul.f32 %v1808, %v1798
    %v1811 = vmul.f32 %v1809, %v1801
    %v1812 = vadd.f32 %v1798, %v1810
    %v1813 = vadd.f32 %v1801, %v1811
    %v1814 = vmul.f32 %v1812, 0.7978846
    %v1815 = vmul.f32 %v1813, 0.7978846
    %v1816 = vtanh.pop %v1814
    %v1817 = vtanh.pop %v1815
    %v1818 = vadd.f32 %v1816, 1.0
    %v1819 = vadd.f32 %v1817, 1.0
    %v1820 = vmul.f32 %v1804, %v1818
    %v1821 = vmul.f32 %v1805, %v1819
    %v1822 = vpack.c.bf16 %v1821, %v1820
    %s1823 = scalar_lea.vmem %s8, 32
    %v1824 = vld [vmem:[%s1823] sm:$0xf]
    %v1825 = vld [vmem:[%s1823 + $0x4] sm:$0xf]
    %v1826 = vld [vmem:[%s1823 + $0x8] sm:$0xf]
    %v1827 = vld [vmem:[%s1823 + $0xc] sm:$0xf]
    %v1828 = vld [vmem:[%s1823 + $0x10] sm:$0xf]
    %v1829 = vld [vmem:[%s1823 + $0x14] sm:$0xf]
    %v1830 = vld [vmem:[%s1823 + $0x18] sm:$0xf]
    %v1831 = vld [vmem:[%s1823 + $0x1c] sm:$0xf]
    %v1832 = vlaneseq
    %v1833 = vshrl.u32 %v1832, 7
    %v1834 = vsub.s32 3, %v1833
    %v1835 = vrot.slane %v1076, %v1834
    %v1844 = vunpack.c.l.b16 %v1824
    %v1845 = vunpack.c.l.b16 %v1825
    %v1846 = vunpack.c.l.b16 %v1826
    %v1847 = vunpack.c.l.b16 %v1827
    %v1848 = vunpack.c.l.b16 %v1828
    %v1849 = vunpack.c.l.b16 %v1829
    %v1850 = vunpack.c.l.b16 %v1830
    %v1851 = vunpack.c.l.b16 %v1831
    %v1852 = vpack.c.b16 %v1845, %v1844
    %v1853 = vpack.c.b16 %v1847, %v1846
    %v1854 = vpack.c.b16 %v1849, %v1848
    %v1855 = vpack.c.b16 %v1851, %v1850
    %v1861 = vsel %vm990, %v1822, 0
    %1863 = vmatprep.subr.bf16.mxu0 0
    %1864 = vmatpush1.bf16.msra.mxu0 %v1852
    %1865 = vmatprep.subr.bf16.mxu0 0
    %1866 = vmatpush1.bf16.msra.mxu0 %v1853
    %1867 = vmatprep.subr.bf16.mxu0 0
    %1868 = vmatpush1.bf16.msra.mxu0 %v1854
    %1869 = vmatprep.subr.bf16.mxu0 0
    %1870 = vmatpush1.bf16.msra.mxu0 %v1855
    %1871 = vmatprep.subr.bf16.mxu0 0
    %1872 = vmatpush1.bf16.msra.mxu0 0
    %1873 = vmatprep.subr.bf16.mxu0 0
    %1874 = vmatpush1.bf16.msra.mxu0 0
    %1875 = vmatprep.subr.bf16.mxu0 0
    %1876 = vmatpush1.bf16.msra.mxu0 0
    %1877 = vmatprep.subr.bf16.mxu0 0
    %1878 = vmatpush1.bf16.msra.mxu0 0
    %1879 = vmatprep.subr.bf16.mxu0 0
    %1880 = vmatpush1.bf16.msra.mxu0 0
    %1881 = vmatprep.subr.bf16.mxu0 0
    %1882 = vmatpush1.bf16.msra.mxu0 0
    %1883 = vmatprep.subr.bf16.mxu0 0
    %1884 = vmatpush1.bf16.msra.mxu0 0
    %1885 = vmatprep.subr.bf16.mxu0 0
    %1886 = vmatpush1.bf16.msra.mxu0 0
    %1887 = vmatprep.subr.bf16.mxu0 0
    %1888 = vmatpush1.bf16.msra.mxu0 0
    %1889 = vmatprep.subr.bf16.mxu0 0
    %1890 = vmatpush1.bf16.msra.mxu0 0
    %1891 = vmatprep.subr.bf16.mxu0 0
    %1892 = vmatpush1.bf16.msra.mxu0 0
    %1893 = vmatprep.subr.bf16.mxu0 0
    %1894 = vmatpush1.bf16.msra.mxu0 0
    %1895 = vmatprep.mubr.bf16.mxu0 0
    %1896 = vmatmul.mubr.bf16.gmra.mrb[0].mxu0 %v1861
    %v1897 = vpop.f32.mrb[0].mxu0
    %v1898 = vadd.f32 %v1835, %v1897
    %v1899 = vpop.f32.mrb[0].mxu0
    %v1900 = vpop.f32.mrb[0].mxu0
    %v1901 = vadd.f32 %v1835, %v1900
    %v1902 = vpop.f32.mrb[0].mxu0
    %1903 = vdwg.mxu0
    %v1904 = vadd.f32 %v1736, %v1898
    %v1905 = vadd.f32 %v1737, %v1901
    %v1906 = vsel %vm150, %v1904, 0.0
    %1907 = vadd.xlane.f32.xlu0 %v1906
    %v1908 = vpop.xlane.xlu0 %1907
    %v1909 = vsel %vm150, %v1905, 0.0
    %1910 = vadd.xlane.f32.xlu0 %v1909
    %v1911 = vpop.xlane.xlu0 %1910
    %v1912 = vmul.f32 %v1908, %v157
    %v1913 = vmul.f32 %v1911, %v157
    %v1914 = vsub.f32 %v1904, %v1912
    %v1915 = vsub.f32 %v1905, %v1913
    %v1916 = vmul.f32 %v1914, %v1914
    %v1917 = vmul.f32 %v1915, %v1915
    %v1918 = vsel %vm150, %v1916, 0.0
    %1919 = vadd.xlane.f32.xlu0 %v1918
    %v1920 = vpop.xlane.xlu0 %1919
    %v1921 = vsel %vm150, %v1917, 0.0
    %1922 = vadd.xlane.f32.xlu0 %v1921
    %v1923 = vpop.xlane.xlu0 %1922
    %v1924 = vmul.f32 %v1920, %v157
    %v1925 = vmul.f32 %v1923, %v157
    %v1926 = vadd.f32 %v1924, 1e-12
    %v1927 = vadd.f32 %v1925, 1e-12
    %v1928 = vrsqrt.pop %v1926
    %v1929 = vrsqrt.pop %v1927
    %v1930 = vmul.f32 %v1914, %v1928
    %v1931 = vmul.f32 %v1915, %v1929
    %v1932 = vlaneseq
    %v1933 = vshrl.u32 %v1932, 7
    %v1934 = vsub.s32 2, %v1933
    %v1935 = vrot.slane %v1078, %v1934
    %v1936 = vmul.f32 %v1930, %v1935
    %v1937 = vmul.f32 %v1931, %v1935
    %v1938 = vlaneseq
    %v1939 = vshrl.u32 %v1938, 7
    %v1940 = vsub.s32 3, %v1939
    %v1941 = vrot.slane %v1078, %v1940
    %v1942 = vadd.f32 %v1936, %v1941
    %v1943 = vadd.f32 %v1937, %v1941
    %v1944 = vmul.f32 %v1942, %v1942
    %v1945 = vmul.f32 %v1943, %v1943
    %v1948 = vrot.slane %v1945, 7
    %vm1949 = vcmask 1041409
    %v1950 = vsel %vm1949, %v1948, %v1944
    %vm1952 = vcmask 254976
    %v1953 = vsel %vm1952, %v1950, 0.0
    %1954 = vadd.xlane.f32.xlu0 %v1953
    %v1955 = vpop.xlane.xlu0 %1954
    %v1956 = vmax.f32 %v1955, 1e-24
    %v1957 = vrsqrt.pop %v1956
    %v1959 = vrot.slane %v1957, 1
    %v1962 = vmul.f32 %v1942, %v1957
    %v1963 = vmul.f32 %v1943, %v1959
    %v1966 = vrot.slane %v1963, 7
    %v1967 = vsel %vm1949, %v1966, %v1962
    %1969 = vst.msk [vmem:[#allocation2] sm:$0x3] %vm1952, %v1967
    // Predicated region
    $region46: #{tpu_custom_call.1} parent=1 // pred_check
      _
    $region47: #{tpu_custom_call.1} parent=1 // pred_check_branch
      %1971 = sbr.rel (0) target = $region49
    $region48: #{tpu_custom_call.1} parent=1 // pred_region
      %s1973 = ssub.s32 32, 32
      %1974 = vsyncadd [#allocation3], %s1973
      %s1976 = sshll.u32 [#allocation2], 4
      %s1977 = int_to_ptr.vmem [resolvable:$true] %s1976
      %1979 = dma.vmem_to_hbm [thread:$0]  %s1977, 32, %s11, [#allocation3]
    $region49: #{tpu_custom_call.1} parent=1 // pred_fallthru
      _
    // Predicated region
    $region50: #{tpu_custom_call.1} parent=1 // pred_check
      _
    $region51: #{tpu_custom_call.1} parent=1 // pred_check_branch
      %1981 = sbr.rel (0) target = $region53
    $region52: #{tpu_custom_call.1} parent=1 // pred_region
      %1982 = dma.done [#allocation3], 32
    $region53: #{tpu_custom_call.1} parent=1 // pred_fallthru
      _
    %1983 = vsyncpa [#allocation3], 1

</llo_original>
